<compile_context>
chip_gen: v6e
topology: v6e:2x2x1
jax: 0.10.0
libtpu: 0.0.40
codegen_flags: <defaults>
</compile_context>

<pallas_src>
import functools

import jax
import jax.numpy as jnp
import numpy as np
from jax.experimental import pallas as pl
from jax.experimental.pallas import tpu as pltpu

_BN_EPS = 1e-5


# ----------------------------------------------------------------------------- helpers
def _pick_tile(dim, max_tile=512):
    """Largest multiple-of-128 divisor of `dim` that is <= max_tile (else full dim)."""
    if dim <= max_tile:
        return dim
    t = (max_tile // 128) * 128
    while t >= 128:
        if dim % t == 0:
            return t
        t -= 128
    return dim


# ----------------------------------------------------------------------------- kernel
def _fused_block_kernel(x_ref, gamma_ref, beta_ref, w_ref, b_ref, o_ref, acc_ref,
                        *, use_bn, final_logits, out_valid):
    """One (N-tile, K-tile) grid step of [BN -> ReLU ->] Linear [-> masked LogSoftmax].

    K is the reduction axis (last grid dim); the f32 VMEM scratch `acc_ref`
    accumulates partial matmul results across K tiles (P3 init/finalize pattern).
    BN stats are per-feature over the full (untiled) batch, so computing them on a
    K-tile of the activations is exact.
    """
    k = pl.program_id(1)

    @pl.when(k == 0)
    def _():
        acc_ref[...] = jnp.zeros_like(acc_ref)

    x = x_ref[...].astype(jnp.float32)
    if use_bn:
        # Training-mode BatchNorm1d (biased variance), single fused pass.
        inv_n = 1.0 / x.shape[0]
        s1 = jnp.sum(x, axis=0, keepdims=True)
        s2 = jnp.sum(x * x, axis=0, keepdims=True)
        mean = s1 * inv_n
        var = jnp.maximum(s2 * inv_n - mean * mean, 0.0)
        x = (x - mean) * jax.lax.rsqrt(var + _BN_EPS)
        x = x * gamma_ref[...] + beta_ref[...]
        x = jnp.maximum(x, 0.0)  # ReLU

    acc_ref[...] += jnp.dot(x.astype(w_ref.dtype), w_ref[...],
                            preferred_element_type=jnp.float32)

    @pl.when(k == pl.num_programs(1) - 1)
    def _():
        y = acc_ref[...] + b_ref[...]
        if final_logits:
            # Lane-dense padded logits: mask padded columns, then log-softmax in f32.
            lane = jax.lax.broadcasted_iota(jnp.int32, y.shape, dimension=1)
            y = jnp.where(lane < out_valid, y, jnp.float32(-1e30))
            m = jnp.max(y, axis=-1, keepdims=True)
            z = y - m
            lse = jnp.log(jnp.sum(jnp.exp(z), axis=-1, keepdims=True))
            y = z - lse
        o_ref[...] = y.astype(o_ref.dtype)


def _fused_layer(x, gamma, beta, w, b, *, use_bn, final_logits, out_valid,
                 out_dtype, max_tile=512):
    batch, k_dim = x.shape
    _, n_dim = w.shape
    tk = _pick_tile(k_dim, max_tile)
    # The final (padded) output dim must live in a single N tile so the in-kernel
    # log-softmax sees the whole row.
    tn = n_dim if final_logits else _pick_tile(n_dim, max_tile)
    assert k_dim % tk == 0 and n_dim % tn == 0

    kernel = functools.partial(_fused_block_kernel, use_bn=use_bn,
                               final_logits=final_logits, out_valid=out_valid)
    return pl.pallas_call(
        kernel,
        out_shape=jax.ShapeDtypeStruct((batch, n_dim), out_dtype),
        grid_spec=pltpu.PrefetchScalarGridSpec(
            num_scalar_prefetch=0,
            grid=(n_dim // tn, k_dim // tk),                      # reduction (K) last
            in_specs=[
                pl.BlockSpec((batch, tk), lambda n, k: (0, k)),   # activations (batch untiled)
                pl.BlockSpec((1, tk), lambda n, k: (0, k)),       # BN gamma
                pl.BlockSpec((1, tk), lambda n, k: (0, k)),       # BN beta
                pl.BlockSpec((tk, tn), lambda n, k: (k, n)),      # weight tile (streamed)
                pl.BlockSpec((1, tn), lambda n, k: (0, n)),       # bias
            ],
            out_specs=pl.BlockSpec((batch, tn), lambda n, k: (0, n)),
            scratch_shapes=[pltpu.VMEM((batch, tn), jnp.float32)],
        ),
        compiler_params=pltpu.CompilerParams(
            dimension_semantics=("parallel", "arbitrary")),
    )(x, gamma, beta, w, b)


# ----------------------------------------------------------------------------- params
def make_discriminator_params(key, in_size=512, h=2048, out_size=2, layer=4):
    """Mirror torch __init__: Linear weights xavier_uniform_, biases 0; BN gamma=1, beta=0.
    Weights stored as [in, out] in bf16 (kernel computes x @ W + b); the last Linear is
    zero-padded to a multiple of 128 output lanes for lane-dense final stores."""
    def xavier(k, fan_in, fan_out):
        bound = np.sqrt(6.0 / (fan_in + fan_out))
        return jax.random.uniform(k, (fan_in, fan_out), jnp.float32, -bound, bound)

    keys = jax.random.split(key, layer)
    out_pad = ((out_size + 127) // 128) * 128
    params = [(xavier(keys[0], in_size, h).astype(jnp.bfloat16),
               jnp.zeros((1, h), jnp.float32))]
    for i in range(1, layer):
        fan_out = h if i < layer - 1 else out_size
        w = xavier(keys[i], h, fan_out)
        b = jnp.zeros((1, fan_out), jnp.float32)
        if i == layer - 1:
            w = jnp.pad(w, ((0, 0), (0, out_pad - out_size)))
            b = jnp.pad(b, ((0, 0), (0, out_pad - out_size)))
        params.append((jnp.ones((1, h), jnp.float32),     # gamma
                       jnp.zeros((1, h), jnp.float32),    # beta
                       w.astype(jnp.bfloat16),            # W
                       b))                                # bias (f32)
    return params


# ----------------------------------------------------------------------------- wrapper
@functools.partial(jax.jit, static_argnames=("out_size",))
def discriminator_forward(features, alpha, params, out_size=2):
    """Returns (domain_output, non_reversed_output), each [batch, out_size] log-probs.

    ReverseLayerF only scales gradients; its forward is the identity, so the two
    branches of the torch module are bit-identical -> compute once, return twice.
    """
    del alpha  # TODO(synk): ReverseLayerF gradient reversal is backward-only; forward is identity.
    w0, b0 = params[0]
    in_size = w0.shape[0]
    dummy_gamma = jnp.ones((1, in_size), jnp.float32)    # layer 0 has no BN
    dummy_beta = jnp.zeros((1, in_size), jnp.float32)

    h = _fused_layer(features.astype(jnp.bfloat16), dummy_gamma, dummy_beta, w0, b0,
                     use_bn=False, final_logits=False, out_valid=0,
                     out_dtype=jnp.bfloat16)
    blocks = params[1:]
    for i, (gamma, beta, w, b) in enumerate(blocks):
        last = i == len(blocks) - 1
        h = _fused_layer(h, gamma, beta, w, b,
                         use_bn=True, final_logits=last, out_valid=out_size,
                         out_dtype=jnp.float32 if last else jnp.bfloat16)

    out = h[:, :out_size]
    return out, out


# ----------------------------------------------------------------------------- reference
def _reference_forward(features, params, out_size):
    """Pure-JAX reference with the same quantization points as the kernel
    (bf16 matmul inputs / stored activations, f32 accumulation, f32 BN & log-softmax)."""
    w0, b0 = params[0]
    h = jnp.dot(features.astype(jnp.bfloat16), w0,
                preferred_element_type=jnp.float32) + b0
    for gamma, beta, w, b in params[1:]:
        x = h.astype(jnp.bfloat16).astype(jnp.float32)   # kernel stores activations in bf16
        mean = jnp.mean(x, axis=0, keepdims=True)
        var = jnp.mean(jnp.square(x - mean), axis=0, keepdims=True)
        x = (x - mean) * jax.lax.rsqrt(var + _BN_EPS) * gamma + beta
        x = jnp.maximum(x, 0.0)
        h = jnp.dot(x.astype(jnp.bfloat16), w,
                    preferred_element_type=jnp.float32) + b
    return jax.nn.log_softmax(h[:, :out_size], axis=-1)


# ----------------------------------------------------------------------------- main
if __name__ == "__main__":
    # Small shapes consistent with the module (constructor args are configurable).
    BATCH, IN_SIZE, H, OUT_SIZE, LAYER = 16, 128, 256, 2, 4

    key = jax.random.PRNGKey(0)
    k_feat, k_params = jax.random.split(key)

    features = jax.random.normal(k_feat, (BATCH, IN_SIZE), jnp.float32)
    alpha = 0.5
    params = make_discriminator_params(k_params, IN_SIZE, H, OUT_SIZE, LAYER)

    domain_out, non_rev_out = discriminator_forward(features, alpha, params,
                                                    out_size=OUT_SIZE)
    domain_out = jax.block_until_ready(domain_out)
    non_rev_out = jax.block_until_ready(non_rev_out)

    ref = jax.block_until_ready(_reference_forward(features, params, OUT_SIZE))
    np.testing.assert_allclose(np.asarray(domain_out), np.asarray(ref),
                               rtol=1e-2, atol=1e-2)
    np.testing.assert_allclose(np.asarray(non_rev_out), np.asarray(ref),
                               rtol=1e-2, atol=1e-2)

    print("KERNEL_OK")
</pallas_src>

<mosaic_0001>
module attributes {stable_mosaic.version = 11 : i64} {
  func.func @_fused_block_kernel(%arg0: i32, %arg1: i32, %arg2: memref<16x256xbf16, #tpu.memory_space<vmem>>, %arg3: memref<1x256xf32, #tpu.memory_space<vmem>>, %arg4: memref<1x256xf32, #tpu.memory_space<vmem>>, %arg5: memref<256x256xbf16, #tpu.memory_space<vmem>>, %arg6: memref<1x256xf32, #tpu.memory_space<vmem>>, %arg7: memref<16x256xbf16, #tpu.memory_space<vmem>>, %arg8: memref<16x256xf32, #tpu.memory_space<vmem>>) attributes {dimension_semantics = [#tpu.dimension_semantics<parallel>, #tpu.dimension_semantics<arbitrary>], iteration_bounds = array<i64: 1, 1>, scalar_prefetch = 0 : i64, scratch_operands = 1 : i64, tpu.core_type = #tpu.core_type<tc>, window_params = [{transform_indices = @transform_0, window_bounds = array<i64: 16, 256>}, {transform_indices = @transform_1, window_bounds = array<i64: 1, 256>}, {transform_indices = @transform_2, window_bounds = array<i64: 1, 256>}, {transform_indices = @transform_3, window_bounds = array<i64: 256, 256>}, {transform_indices = @transform_4, window_bounds = array<i64: 1, 256>}, {transform_indices = @transform_5, window_bounds = array<i64: 16, 256>}]} {
    %c0_i32 = arith.constant 0 : i32
    %0 = arith.cmpi eq, %arg1, %c0_i32 : i32
    %1 = arith.extui %0 : i1 to i32
    %c0_i32_0 = arith.constant 0 : i32
    %2 = arith.cmpi ne, %1, %c0_i32_0 : i32
    scf.if %2 {
      %cst_21 = arith.constant 0.000000e+00 : f32
      %42 = vector.broadcast %cst_21 : f32 to vector<16x256xf32>
      %c0_22 = arith.constant 0 : index
      %c0_23 = arith.constant 0 : index
      %43 = vector.load %arg8[%c0_22, %c0_23] : memref<16x256xf32, #tpu.memory_space<vmem>>, vector<16x256xf32>
      tpu.vector_store %arg8[%c0_22, %c0_23], %42 {strides = array<i32>} : memref<16x256xf32, #tpu.memory_space<vmem>>, vector<16x256xf32>,
    } else {
    }
    %c0 = arith.constant 0 : index
    %c0_1 = arith.constant 0 : index
    %3 = vector.load %arg2[%c0, %c0_1] : memref<16x256xbf16, #tpu.memory_space<vmem>>, vector<16x256xbf16>
    %4 = arith.extf %3 : vector<16x256xbf16> to vector<16x256xf32>
    %cst = arith.constant dense<0.000000e+00> : vector<256xf32>
    %5 = vector.multi_reduction <add>, %4, %cst [0] : vector<16x256xf32> to vector<256xf32>
    %6 = vector.shape_cast %5 : vector<256xf32> to vector<1x256xf32>
    %7 = arith.mulf %4, %4 : vector<16x256xf32>
    %cst_2 = arith.constant dense<0.000000e+00> : vector<256xf32>
    %8 = vector.multi_reduction <add>, %7, %cst_2 [0] : vector<16x256xf32> to vector<256xf32>
    %9 = vector.shape_cast %8 : vector<256xf32> to vector<1x256xf32>
    %cst_3 = arith.constant 6.250000e-02 : f32
    %10 = vector.broadcast %cst_3 : f32 to vector<1x256xf32>
    %11 = arith.mulf %6, %10 : vector<1x256xf32>
    %cst_4 = arith.constant 6.250000e-02 : f32
    %12 = vector.broadcast %cst_4 : f32 to vector<1x256xf32>
    %13 = arith.mulf %9, %12 : vector<1x256xf32>
    %14 = arith.mulf %11, %11 : vector<1x256xf32>
    %15 = arith.subf %13, %14 : vector<1x256xf32>
    %cst_5 = arith.constant 0.000000e+00 : f32
    %16 = vector.broadcast %cst_5 : f32 to vector<1x256xf32>
    %17 = arith.maximumf %15, %16 : vector<1x256xf32>
    %18 = vector.broadcast %11 : vector<1x256xf32> to vector<16x256xf32>
    %19 = arith.subf %4, %18 : vector<16x256xf32>
    %cst_6 = arith.constant 9.99999974E-6 : f32
    %20 = vector.broadcast %cst_6 : f32 to vector<1x256xf32>
    %21 = arith.addf %17, %20 : vector<1x256xf32>
    %22 = math.rsqrt %21 : vector<1x256xf32>
    %23 = vector.broadcast %22 : vector<1x256xf32> to vector<16x256xf32>
    %24 = arith.mulf %19, %23 : vector<16x256xf32>
    %c0_7 = arith.constant 0 : index
    %c0_8 = arith.constant 0 : index
    %25 = vector.load %arg3[%c0_7, %c0_8] : memref<1x256xf32, #tpu.memory_space<vmem>>, vector<1x256xf32>
    %26 = vector.broadcast %25 : vector<1x256xf32> to vector<16x256xf32>
    %27 = arith.mulf %24, %26 : vector<16x256xf32>
    %c0_9 = arith.constant 0 : index
    %c0_10 = arith.constant 0 : index
    %28 = vector.load %arg4[%c0_9, %c0_10] : memref<1x256xf32, #tpu.memory_space<vmem>>, vector<1x256xf32>
    %29 = vector.broadcast %28 : vector<1x256xf32> to vector<16x256xf32>
    %30 = arith.addf %27, %29 : vector<16x256xf32>
    %cst_11 = arith.constant 0.000000e+00 : f32
    %31 = vector.broadcast %cst_11 : f32 to vector<16x256xf32>
    %32 = arith.maximumf %30, %31 : vector<16x256xf32>
    %c0_12 = arith.constant 0 : index
    %c0_13 = arith.constant 0 : index
    %33 = vector.load %arg8[%c0_12, %c0_13] : memref<16x256xf32, #tpu.memory_space<vmem>>, vector<16x256xf32>
    %34 = arith.truncf %32 : vector<16x256xf32> to vector<16x256xbf16>
    %c0_14 = arith.constant 0 : index
    %c0_15 = arith.constant 0 : index
    %35 = vector.load %arg5[%c0_14, %c0_15] : memref<256x256xbf16, #tpu.memory_space<vmem>>, vector<256x256xbf16>
    %cst_16 = arith.constant dense<0.000000e+00> : vector<16x256xf32>
    %36 = tpu.matmul %34, %35, %cst_16 {dimension_numbers = #tpu.dot_dimension_numbers<[1], [0], [0], [1], [0, 0, 1, 1], [], []>} : vector<16x256xbf16>, vector<256x256xbf16>, vector<16x256xf32> -> vector<16x256xf32>
    %37 = arith.addf %33, %36 : vector<16x256xf32>
    %c0_17 = arith.constant 0 : index
    %c0_18 = arith.constant 0 : index
    %38 = vector.load %arg8[%c0_17, %c0_18] : memref<16x256xf32, #tpu.memory_space<vmem>>, vector<16x256xf32>
    tpu.vector_store %arg8[%c0_17, %c0_18], %37 {strides = array<i32>} : memref<16x256xf32, #tpu.memory_space<vmem>>, vector<16x256xf32>,
    %c0_i32_19 = arith.constant 0 : i32
    %39 = arith.cmpi eq, %arg1, %c0_i32_19 : i32
    %40 = arith.extui %39 : i1 to i32
    %c0_i32_20 = arith.constant 0 : i32
    %41 = arith.cmpi ne, %40, %c0_i32_20 : i32
    scf.if %41 {
      %c0_21 = arith.constant 0 : index
      %c0_22 = arith.constant 0 : index
      %42 = vector.load %arg8[%c0_21, %c0_22] : memref<16x256xf32, #tpu.memory_space<vmem>>, vector<16x256xf32>
      %c0_23 = arith.constant 0 : index
      %c0_24 = arith.constant 0 : index
      %43 = vector.load %arg6[%c0_23, %c0_24] : memref<1x256xf32, #tpu.memory_space<vmem>>, vector<1x256xf32>
      %44 = vector.broadcast %43 : vector<1x256xf32> to vector<16x256xf32>
      %45 = arith.addf %42, %44 : vector<16x256xf32>
      %46 = arith.truncf %45 : vector<16x256xf32> to vector<16x256xbf16>
      %c0_25 = arith.constant 0 : index
      %c0_26 = arith.constant 0 : index
      %47 = vector.load %arg7[%c0_25, %c0_26] : memref<16x256xbf16, #tpu.memory_space<vmem>>, vector<16x256xbf16>
      tpu.vector_store %arg7[%c0_25, %c0_26], %46 {strides = array<i32>} : memref<16x256xbf16, #tpu.memory_space<vmem>>, vector<16x256xbf16>,
    } else {
    }
    return
  }
  func.func @transform_0(%arg0: i32, %arg1: i32) -> (i32, i32) {
    %c0_i32 = arith.constant 0 : i32
    %c0_i32_0 = arith.constant 0 : i32
    return %c0_i32, %arg1 : i32, i32
  }
  func.func @transform_1(%arg0: i32, %arg1: i32) -> (i32, i32) {
    %c0_i32 = arith.constant 0 : i32
    %c0_i32_0 = arith.constant 0 : i32
    return %c0_i32, %arg1 : i32, i32
  }
  func.func @transform_2(%arg0: i32, %arg1: i32) -> (i32, i32) {
    %c0_i32 = arith.constant 0 : i32
    %c0_i32_0 = arith.constant 0 : i32
    return %c0_i32, %arg1 : i32, i32
  }
  func.func @transform_3(%arg0: i32, %arg1: i32) -> (i32, i32) {
    %c0_i32 = arith.constant 0 : i32
    return %arg1, %arg0 : i32, i32
  }
  func.func @transform_4(%arg0: i32, %arg1: i32) -> (i32, i32) {
    %c0_i32 = arith.constant 0 : i32
    %c0_i32_0 = arith.constant 0 : i32
    return %c0_i32, %arg0 : i32, i32
  }
  func.func @transform_5(%arg0: i32, %arg1: i32) -> (i32, i32) {
    %c0_i32 = arith.constant 0 : i32
    %c0_i32_0 = arith.constant 0 : i32
    return %c0_i32, %arg0 : i32, i32
  }
}

module attributes {stable_mosaic.version = 11 : i64} {
  func.func @_fused_block_kernel(%arg0: i32, %arg1: i32, %arg2: memref<16x128xbf16, #tpu.memory_space<vmem>>, %arg3: memref<1x128xf32, #tpu.memory_space<vmem>>, %arg4: memref<1x128xf32, #tpu.memory_space<vmem>>, %arg5: memref<128x256xbf16, #tpu.memory_space<vmem>>, %arg6: memref<1x256xf32, #tpu.memory_space<vmem>>, %arg7: memref<16x256xbf16, #tpu.memory_space<vmem>>, %arg8: memref<16x256xf32, #tpu.memory_space<vmem>>) attributes {dimension_semantics = [#tpu.dimension_semantics<parallel>, #tpu.dimension_semantics<arbitrary>], iteration_bounds = array<i64: 1, 1>, scalar_prefetch = 0 : i64, scratch_operands = 1 : i64, tpu.core_type = #tpu.core_type<tc>, window_params = [{transform_indices = @transform_0, window_bounds = array<i64: 16, 128>}, {transform_indices = @transform_1, window_bounds = array<i64: 1, 128>}, {transform_indices = @transform_2, window_bounds = array<i64: 1, 128>}, {transform_indices = @transform_3, window_bounds = array<i64: 128, 256>}, {transform_indices = @transform_4, window_bounds = array<i64: 1, 256>}, {transform_indices = @transform_5, window_bounds = array<i64: 16, 256>}]} {
    %c0_i32 = arith.constant 0 : i32
    %0 = arith.cmpi eq, %arg1, %c0_i32 : i32
    %1 = arith.extui %0 : i1 to i32
    %c0_i32_0 = arith.constant 0 : i32
    %2 = arith.cmpi ne, %1, %c0_i32_0 : i32
    scf.if %2 {
      %cst_10 = arith.constant 0.000000e+00 : f32
      %14 = vector.broadcast %cst_10 : f32 to vector<16x256xf32>
      %c0_11 = arith.constant 0 : index
      %c0_12 = arith.constant 0 : index
      %15 = vector.load %arg8[%c0_11, %c0_12] : memref<16x256xf32, #tpu.memory_space<vmem>>, vector<16x256xf32>
      tpu.vector_store %arg8[%c0_11, %c0_12], %14 {strides = array<i32>} : memref<16x256xf32, #tpu.memory_space<vmem>>, vector<16x256xf32>,
    } else {
    }
    %c0 = arith.constant 0 : index
    %c0_1 = arith.constant 0 : index
    %3 = vector.load %arg2[%c0, %c0_1] : memref<16x128xbf16, #tpu.memory_space<vmem>>, vector<16x128xbf16>
    %4 = arith.extf %3 : vector<16x128xbf16> to vector<16x128xf32>
    %c0_2 = arith.constant 0 : index
    %c0_3 = arith.constant 0 : index
    %5 = vector.load %arg8[%c0_2, %c0_3] : memref<16x256xf32, #tpu.memory_space<vmem>>, vector<16x256xf32>
    %6 = arith.truncf %4 : vector<16x128xf32> to vector<16x128xbf16>
    %c0_4 = arith.constant 0 : index
    %c0_5 = arith.constant 0 : index
    %7 = vector.load %arg5[%c0_4, %c0_5] : memref<128x256xbf16, #tpu.memory_space<vmem>>, vector<128x256xbf16>
    %cst = arith.constant dense<0.000000e+00> : vector<16x256xf32>
    %8 = tpu.matmul %6, %7, %cst {dimension_numbers = #tpu.dot_dimension_numbers<[1], [0], [0], [1], [0, 0, 1, 1], [], []>} : vector<16x128xbf16>, vector<128x256xbf16>, vector<16x256xf32> -> vector<16x256xf32>
    %9 = arith.addf %5, %8 : vector<16x256xf32>
    %c0_6 = arith.constant 0 : index
    %c0_7 = arith.constant 0 : index
    %10 = vector.load %arg8[%c0_6, %c0_7] : memref<16x256xf32, #tpu.memory_space<vmem>>, vector<16x256xf32>
    tpu.vector_store %arg8[%c0_6, %c0_7], %9 {strides = array<i32>} : memref<16x256xf32, #tpu.memory_space<vmem>>, vector<16x256xf32>,
    %c0_i32_8 = arith.constant 0 : i32
    %11 = arith.cmpi eq, %arg1, %c0_i32_8 : i32
    %12 = arith.extui %11 : i1 to i32
    %c0_i32_9 = arith.constant 0 : i32
    %13 = arith.cmpi ne, %12, %c0_i32_9 : i32
    scf.if %13 {
      %c0_10 = arith.constant 0 : index
      %c0_11 = arith.constant 0 : index
      %14 = vector.load %arg8[%c0_10, %c0_11] : memref<16x256xf32, #tpu.memory_space<vmem>>, vector<16x256xf32>
      %c0_12 = arith.constant 0 : index
      %c0_13 = arith.constant 0 : index
      %15 = vector.load %arg6[%c0_12, %c0_13] : memref<1x256xf32, #tpu.memory_space<vmem>>, vector<1x256xf32>
      %16 = vector.broadcast %15 : vector<1x256xf32> to vector<16x256xf32>
      %17 = arith.addf %14, %16 : vector<16x256xf32>
      %18 = arith.truncf %17 : vector<16x256xf32> to vector<16x256xbf16>
      %c0_14 = arith.constant 0 : index
      %c0_15 = arith.constant 0 : index
      %19 = vector.load %arg7[%c0_14, %c0_15] : memref<16x256xbf16, #tpu.memory_space<vmem>>, vector<16x256xbf16>
      tpu.vector_store %arg7[%c0_14, %c0_15], %18 {strides = array<i32>} : memref<16x256xbf16, #tpu.memory_space<vmem>>, vector<16x256xbf16>,
    } else {
    }
    return
  }
  func.func @transform_0(%arg0: i32, %arg1: i32) -> (i32, i32) {
    %c0_i32 = arith.constant 0 : i32
    %c0_i32_0 = arith.constant 0 : i32
    return %c0_i32, %arg1 : i32, i32
  }
  func.func @transform_1(%arg0: i32, %arg1: i32) -> (i32, i32) {
    %c0_i32 = arith.constant 0 : i32
    %c0_i32_0 = arith.constant 0 : i32
    return %c0_i32, %arg1 : i32, i32
  }
  func.func @transform_2(%arg0: i32, %arg1: i32) -> (i32, i32) {
    %c0_i32 = arith.constant 0 : i32
    %c0_i32_0 = arith.constant 0 : i32
    return %c0_i32, %arg1 : i32, i32
  }
  func.func @transform_3(%arg0: i32, %arg1: i32) -> (i32, i32) {
    %c0_i32 = arith.constant 0 : i32
    return %arg1, %arg0 : i32, i32
  }
  func.func @transform_4(%arg0: i32, %arg1: i32) -> (i32, i32) {
    %c0_i32 = arith.constant 0 : i32
    %c0_i32_0 = arith.constant 0 : i32
    return %c0_i32, %arg0 : i32, i32
  }
  func.func @transform_5(%arg0: i32, %arg1: i32) -> (i32, i32) {
    %c0_i32 = arith.constant 0 : i32
    %c0_i32_0 = arith.constant 0 : i32
    return %c0_i32, %arg0 : i32, i32
  }
}

module attributes {stable_mosaic.version = 11 : i64} {
  func.func @_fused_block_kernel(%arg0: i32, %arg1: i32, %arg2: memref<16x256xbf16, #tpu.memory_space<vmem>>, %arg3: memref<1x256xf32, #tpu.memory_space<vmem>>, %arg4: memref<1x256xf32, #tpu.memory_space<vmem>>, %arg5: memref<256x128xbf16, #tpu.memory_space<vmem>>, %arg6: memref<1x128xf32, #tpu.memory_space<vmem>>, %arg7: memref<16x128xf32, #tpu.memory_space<vmem>>, %arg8: memref<16x128xf32, #tpu.memory_space<vmem>>) attributes {dimension_semantics = [#tpu.dimension_semantics<parallel>, #tpu.dimension_semantics<arbitrary>], iteration_bounds = array<i64: 1, 1>, scalar_prefetch = 0 : i64, scratch_operands = 1 : i64, tpu.core_type = #tpu.core_type<tc>, window_params = [{transform_indices = @transform_0, window_bounds = array<i64: 16, 256>}, {transform_indices = @transform_1, window_bounds = array<i64: 1, 256>}, {transform_indices = @transform_2, window_bounds = array<i64: 1, 256>}, {transform_indices = @transform_3, window_bounds = array<i64: 256, 128>}, {transform_indices = @transform_4, window_bounds = array<i64: 1, 128>}, {transform_indices = @transform_5, window_bounds = array<i64: 16, 128>}]} {
    %c0_i32 = arith.constant 0 : i32
    %0 = arith.cmpi eq, %arg1, %c0_i32 : i32
    %1 = arith.extui %0 : i1 to i32
    %c0_i32_0 = arith.constant 0 : i32
    %2 = arith.cmpi ne, %1, %c0_i32_0 : i32
    scf.if %2 {
      %cst_21 = arith.constant 0.000000e+00 : f32
      %42 = vector.broadcast %cst_21 : f32 to vector<16x128xf32>
      %c0_22 = arith.constant 0 : index
      %c0_23 = arith.constant 0 : index
      %43 = vector.load %arg8[%c0_22, %c0_23] : memref<16x128xf32, #tpu.memory_space<vmem>>, vector<16x128xf32>
      tpu.vector_store %arg8[%c0_22, %c0_23], %42 {strides = array<i32>} : memref<16x128xf32, #tpu.memory_space<vmem>>, vector<16x128xf32>,
    } else {
    }
    %c0 = arith.constant 0 : index
    %c0_1 = arith.constant 0 : index
    %3 = vector.load %arg2[%c0, %c0_1] : memref<16x256xbf16, #tpu.memory_space<vmem>>, vector<16x256xbf16>
    %4 = arith.extf %3 : vector<16x256xbf16> to vector<16x256xf32>
    %cst = arith.constant dense<0.000000e+00> : vector<256xf32>
    %5 = vector.multi_reduction <add>, %4, %cst [0] : vector<16x256xf32> to vector<256xf32>
    %6 = vector.shape_cast %5 : vector<256xf32> to vector<1x256xf32>
    %7 = arith.mulf %4, %4 : vector<16x256xf32>
    %cst_2 = arith.constant dense<0.000000e+00> : vector<256xf32>
    %8 = vector.multi_reduction <add>, %7, %cst_2 [0] : vector<16x256xf32> to vector<256xf32>
    %9 = vector.shape_cast %8 : vector<256xf32> to vector<1x256xf32>
    %cst_3 = arith.constant 6.250000e-02 : f32
    %10 = vector.broadcast %cst_3 : f32 to vector<1x256xf32>
    %11 = arith.mulf %6, %10 : vector<1x256xf32>
    %cst_4 = arith.constant 6.250000e-02 : f32
    %12 = vector.broadcast %cst_4 : f32 to vector<1x256xf32>
    %13 = arith.mulf %9, %12 : vector<1x256xf32>
    %14 = arith.mulf %11, %11 : vector<1x256xf32>
    %15 = arith.subf %13, %14 : vector<1x256xf32>
    %cst_5 = arith.constant 0.000000e+00 : f32
    %16 = vector.broadcast %cst_5 : f32 to vector<1x256xf32>
    %17 = arith.maximumf %15, %16 : vector<1x256xf32>
    %18 = vector.broadcast %11 : vector<1x256xf32> to vector<16x256xf32>
    %19 = arith.subf %4, %18 : vector<16x256xf32>
    %cst_6 = arith.constant 9.99999974E-6 : f32
    %20 = vector.broadcast %cst_6 : f32 to vector<1x256xf32>
    %21 = arith.addf %17, %20 : vector<1x256xf32>
    %22 = math.rsqrt %21 : vector<1x256xf32>
    %23 = vector.broadcast %22 : vector<1x256xf32> to vector<16x256xf32>
    %24 = arith.mulf %19, %23 : vector<16x256xf32>
    %c0_7 = arith.constant 0 : index
    %c0_8 = arith.constant 0 : index
    %25 = vector.load %arg3[%c0_7, %c0_8] : memref<1x256xf32, #tpu.memory_space<vmem>>, vector<1x256xf32>
    %26 = vector.broadcast %25 : vector<1x256xf32> to vector<16x256xf32>
    %27 = arith.mulf %24, %26 : vector<16x256xf32>
    %c0_9 = arith.constant 0 : index
    %c0_10 = arith.constant 0 : index
    %28 = vector.load %arg4[%c0_9, %c0_10] : memref<1x256xf32, #tpu.memory_space<vmem>>, vector<1x256xf32>
    %29 = vector.broadcast %28 : vector<1x256xf32> to vector<16x256xf32>
    %30 = arith.addf %27, %29 : vector<16x256xf32>
    %cst_11 = arith.constant 0.000000e+00 : f32
    %31 = vector.broadcast %cst_11 : f32 to vector<16x256xf32>
    %32 = arith.maximumf %30, %31 : vector<16x256xf32>
    %c0_12 = arith.constant 0 : index
    %c0_13 = arith.constant 0 : index
    %33 = vector.load %arg8[%c0_12, %c0_13] : memref<16x128xf32, #tpu.memory_space<vmem>>, vector<16x128xf32>
    %34 = arith.truncf %32 : vector<16x256xf32> to vector<16x256xbf16>
    %c0_14 = arith.constant 0 : index
    %c0_15 = arith.constant 0 : index
    %35 = vector.load %arg5[%c0_14, %c0_15] : memref<256x128xbf16, #tpu.memory_space<vmem>>, vector<256x128xbf16>
    %cst_16 = arith.constant dense<0.000000e+00> : vector<16x128xf32>
    %36 = tpu.matmul %34, %35, %cst_16 {dimension_numbers = #tpu.dot_dimension_numbers<[1], [0], [0], [1], [0, 0, 1, 1], [], []>} : vector<16x256xbf16>, vector<256x128xbf16>, vector<16x128xf32> -> vector<16x128xf32>
    %37 = arith.addf %33, %36 : vector<16x128xf32>
    %c0_17 = arith.constant 0 : index
    %c0_18 = arith.constant 0 : index
    %38 = vector.load %arg8[%c0_17, %c0_18] : memref<16x128xf32, #tpu.memory_space<vmem>>, vector<16x128xf32>
    tpu.vector_store %arg8[%c0_17, %c0_18], %37 {strides = array<i32>} : memref<16x128xf32, #tpu.memory_space<vmem>>, vector<16x128xf32>,
    %c0_i32_19 = arith.constant 0 : i32
    %39 = arith.cmpi eq, %arg1, %c0_i32_19 : i32
    %40 = arith.extui %39 : i1 to i32
    %c0_i32_20 = arith.constant 0 : i32
    %41 = arith.cmpi ne, %40, %c0_i32_20 : i32
    scf.if %41 {
      %c0_21 = arith.constant 0 : index
      %c0_22 = arith.constant 0 : index
      %42 = vector.load %arg8[%c0_21, %c0_22] : memref<16x128xf32, #tpu.memory_space<vmem>>, vector<16x128xf32>
      %c0_23 = arith.constant 0 : index
      %c0_24 = arith.constant 0 : index
      %43 = vector.load %arg6[%c0_23, %c0_24] : memref<1x128xf32, #tpu.memory_space<vmem>>, vector<1x128xf32>
      %44 = vector.broadcast %43 : vector<1x128xf32> to vector<16x128xf32>
      %45 = arith.addf %42, %44 : vector<16x128xf32>
      %46 = tpu.iota {dimensions = array<i32: 1>} : vector<16x128xi32>
      %c2_i32 = arith.constant 2 : i32
      %47 = vector.broadcast %c2_i32 : i32 to vector<16x128xi32>
      %48 = arith.cmpi slt, %46, %47 : vector<16x128xi32>
      %cst_25 = arith.constant -1.000000e+30 : f32
      %49 = vector.broadcast %cst_25 : f32 to vector<16x128xf32>
      %50 = arith.select %48, %45, %49 : vector<16x128xi1>, vector<16x128xf32>
      %cst_26 = arith.constant dense<0xFF800000> : vector<16xf32>
      %51 = vector.multi_reduction <maximumf>, %50, %cst_26 [1] : vector<16x128xf32> to vector<16xf32>
      %52 = vector.shape_cast %51 : vector<16xf32> to vector<16x1xf32>
      %53 = vector.broadcast %52 : vector<16x1xf32> to vector<16x128xf32>
      %54 = arith.subf %50, %53 : vector<16x128xf32>
      %55 = math.exp %54 : vector<16x128xf32>
      %cst_27 = arith.constant dense<0.000000e+00> : vector<16xf32>
      %56 = vector.multi_reduction <add>, %55, %cst_27 [1] : vector<16x128xf32> to vector<16xf32>
      %57 = vector.shape_cast %56 : vector<16xf32> to vector<16x1xf32>
      %58 = math.log %57 : vector<16x1xf32>
      %59 = vector.broadcast %58 : vector<16x1xf32> to vector<16x128xf32>
      %60 = arith.subf %54, %59 : vector<16x128xf32>
      %c0_28 = arith.constant 0 : index
      %c0_29 = arith.constant 0 : index
      %61 = vector.load %arg7[%c0_28, %c0_29] : memref<16x128xf32, #tpu.memory_space<vmem>>, vector<16x128xf32>
      tpu.vector_store %arg7[%c0_28, %c0_29], %60 {strides = array<i32>} : memref<16x128xf32, #tpu.memory_space<vmem>>, vector<16x128xf32>,
    } else {
    }
    return
  }
  func.func @transform_0(%arg0: i32, %arg1: i32) -> (i32, i32) {
    %c0_i32 = arith.constant 0 : i32
    %c0_i32_0 = arith.constant 0 : i32
    return %c0_i32, %arg1 : i32, i32
  }
  func.func @transform_1(%arg0: i32, %arg1: i32) -> (i32, i32) {
    %c0_i32 = arith.constant 0 : i32
    %c0_i32_0 = arith.constant 0 : i32
    return %c0_i32, %arg1 : i32, i32
  }
  func.func @transform_2(%arg0: i32, %arg1: i32) -> (i32, i32) {
    %c0_i32 = arith.constant 0 : i32
    %c0_i32_0 = arith.constant 0 : i32
    return %c0_i32, %arg1 : i32, i32
  }
  func.func @transform_3(%arg0: i32, %arg1: i32) -> (i32, i32) {
    %c0_i32 = arith.constant 0 : i32
    return %arg1, %arg0 : i32, i32
  }
  func.func @transform_4(%arg0: i32, %arg1: i32) -> (i32, i32) {
    %c0_i32 = arith.constant 0 : i32
    %c0_i32_0 = arith.constant 0 : i32
    return %c0_i32, %arg0 : i32, i32
  }
  func.func @transform_5(%arg0: i32, %arg1: i32) -> (i32, i32) {
    %c0_i32 = arith.constant 0 : i32
    %c0_i32_0 = arith.constant 0 : i32
    return %c0_i32, %arg0 : i32, i32
  }
}

module attributes {stable_mosaic.version = 11 : i64} {
  func.func @_fused_block_kernel(%arg0: i32, %arg1: i32, %arg2: memref<16x256xbf16, #tpu.memory_space<vmem>>, %arg3: memref<1x256xf32, #tpu.memory_space<vmem>>, %arg4: memref<1x256xf32, #tpu.memory_space<vmem>>, %arg5: memref<256x256xbf16, #tpu.memory_space<vmem>>, %arg6: memref<1x256xf32, #tpu.memory_space<vmem>>, %arg7: memref<16x256xbf16, #tpu.memory_space<vmem>>, %arg8: memref<16x256xf32, #tpu.memory_space<vmem>>) attributes {dimension_semantics = [#tpu.dimension_semantics<parallel>, #tpu.dimension_semantics<arbitrary>], iteration_bounds = array<i64: 1, 1>, scalar_prefetch = 0 : i64, scratch_operands = 1 : i64, tpu.core_type = #tpu.core_type<tc>, window_params = [{transform_indices = @transform_0, window_bounds = array<i64: 16, 256>}, {transform_indices = @transform_1, window_bounds = array<i64: 1, 256>}, {transform_indices = @transform_2, window_bounds = array<i64: 1, 256>}, {transform_indices = @transform_3, window_bounds = array<i64: 256, 256>}, {transform_indices = @transform_4, window_bounds = array<i64: 1, 256>}, {transform_indices = @transform_5, window_bounds = array<i64: 16, 256>}]} {
    %c0_i32 = arith.constant 0 : i32
    %0 = arith.cmpi eq, %arg1, %c0_i32 : i32
    %1 = arith.extui %0 : i1 to i32
    %c0_i32_0 = arith.constant 0 : i32
    %2 = arith.cmpi ne, %1, %c0_i32_0 : i32
    scf.if %2 {
      %cst_21 = arith.constant 0.000000e+00 : f32
      %42 = vector.broadcast %cst_21 : f32 to vector<16x256xf32>
      %c0_22 = arith.constant 0 : index
      %c0_23 = arith.constant 0 : index
      %43 = vector.load %arg8[%c0_22, %c0_23] : memref<16x256xf32, #tpu.memory_space<vmem>>, vector<16x256xf32>
      tpu.vector_store %arg8[%c0_22, %c0_23], %42 {strides = array<i32>} : memref<16x256xf32, #tpu.memory_space<vmem>>, vector<16x256xf32>,
    } else {
    }
    %c0 = arith.constant 0 : index
    %c0_1 = arith.constant 0 : index
    %3 = vector.load %arg2[%c0, %c0_1] : memref<16x256xbf16, #tpu.memory_space<vmem>>, vector<16x256xbf16>
    %4 = arith.extf %3 : vector<16x256xbf16> to vector<16x256xf32>
    %cst = arith.constant dense<0.000000e+00> : vector<256xf32>
    %5 = vector.multi_reduction <add>, %4, %cst [0] : vector<16x256xf32> to vector<256xf32>
    %6 = vector.shape_cast %5 : vector<256xf32> to vector<1x256xf32>
    %7 = arith.mulf %4, %4 : vector<16x256xf32>
    %cst_2 = arith.constant dense<0.000000e+00> : vector<256xf32>
    %8 = vector.multi_reduction <add>, %7, %cst_2 [0] : vector<16x256xf32> to vector<256xf32>
    %9 = vector.shape_cast %8 : vector<256xf32> to vector<1x256xf32>
    %cst_3 = arith.constant 6.250000e-02 : f32
    %10 = vector.broadcast %cst_3 : f32 to vector<1x256xf32>
    %11 = arith.mulf %6, %10 : vector<1x256xf32>
    %cst_4 = arith.constant 6.250000e-02 : f32
    %12 = vector.broadcast %cst_4 : f32 to vector<1x256xf32>
    %13 = arith.mulf %9, %12 : vector<1x256xf32>
    %14 = arith.mulf %11, %11 : vector<1x256xf32>
    %15 = arith.subf %13, %14 : vector<1x256xf32>
    %cst_5 = arith.constant 0.000000e+00 : f32
    %16 = vector.broadcast %cst_5 : f32 to vector<1x256xf32>
    %17 = arith.maximumf %15, %16 : vector<1x256xf32>
    %18 = vector.broadcast %11 : vector<1x256xf32> to vector<16x256xf32>
    %19 = arith.subf %4, %18 : vector<16x256xf32>
    %cst_6 = arith.constant 9.99999974E-6 : f32
    %20 = vector.broadcast %cst_6 : f32 to vector<1x256xf32>
    %21 = arith.addf %17, %20 : vector<1x256xf32>
    %22 = math.rsqrt %21 : vector<1x256xf32>
    %23 = vector.broadcast %22 : vector<1x256xf32> to vector<16x256xf32>
    %24 = arith.mulf %19, %23 : vector<16x256xf32>
    %c0_7 = arith.constant 0 : index
    %c0_8 = arith.constant 0 : index
    %25 = vector.load %arg3[%c0_7, %c0_8] : memref<1x256xf32, #tpu.memory_space<vmem>>, vector<1x256xf32>
    %26 = vector.broadcast %25 : vector<1x256xf32> to vector<16x256xf32>
    %27 = arith.mulf %24, %26 : vector<16x256xf32>
    %c0_9 = arith.constant 0 : index
    %c0_10 = arith.constant 0 : index
    %28 = vector.load %arg4[%c0_9, %c0_10] : memref<1x256xf32, #tpu.memory_space<vmem>>, vector<1x256xf32>
    %29 = vector.broadcast %28 : vector<1x256xf32> to vector<16x256xf32>
    %30 = arith.addf %27, %29 : vector<16x256xf32>
    %cst_11 = arith.constant 0.000000e+00 : f32
    %31 = vector.broadcast %cst_11 : f32 to vector<16x256xf32>
    %32 = arith.maximumf %30, %31 : vector<16x256xf32>
    %c0_12 = arith.constant 0 : index
    %c0_13 = arith.constant 0 : index
    %33 = vector.load %arg8[%c0_12, %c0_13] : memref<16x256xf32, #tpu.memory_space<vmem>>, vector<16x256xf32>
    %34 = arith.truncf %32 : vector<16x256xf32> to vector<16x256xbf16>
    %c0_14 = arith.constant 0 : index
    %c0_15 = arith.constant 0 : index
    %35 = vector.load %arg5[%c0_14, %c0_15] : memref<256x256xbf16, #tpu.memory_space<vmem>>, vector<256x256xbf16>
    %cst_16 = arith.constant dense<0.000000e+00> : vector<16x256xf32>
    %36 = tpu.matmul %34, %35, %cst_16 {dimension_numbers = #tpu.dot_dimension_numbers<[1], [0], [0], [1], [0, 0, 1, 1], [], []>} : vector<16x256xbf16>, vector<256x256xbf16>, vector<16x256xf32> -> vector<16x256xf32>
    %37 = arith.addf %33, %36 : vector<16x256xf32>
    %c0_17 = arith.constant 0 : index
    %c0_18 = arith.constant 0 : index
    %38 = vector.load %arg8[%c0_17, %c0_18] : memref<16x256xf32, #tpu.memory_space<vmem>>, vector<16x256xf32>
    tpu.vector_store %arg8[%c0_17, %c0_18], %37 {strides = array<i32>} : memref<16x256xf32, #tpu.memory_space<vmem>>, vector<16x256xf32>,
    %c0_i32_19 = arith.constant 0 : i32
    %39 = arith.cmpi eq, %arg1, %c0_i32_19 : i32
    %40 = arith.extui %39 : i1 to i32
    %c0_i32_20 = arith.constant 0 : i32
    %41 = arith.cmpi ne, %40, %c0_i32_20 : i32
    scf.if %41 {
      %c0_21 = arith.constant 0 : index
      %c0_22 = arith.constant 0 : index
      %42 = vector.load %arg8[%c0_21, %c0_22] : memref<16x256xf32, #tpu.memory_space<vmem>>, vector<16x256xf32>
      %c0_23 = arith.constant 0 : index
      %c0_24 = arith.constant 0 : index
      %43 = vector.load %arg6[%c0_23, %c0_24] : memref<1x256xf32, #tpu.memory_space<vmem>>, vector<1x256xf32>
      %44 = vector.broadcast %43 : vector<1x256xf32> to vector<16x256xf32>
      %45 = arith.addf %42, %44 : vector<16x256xf32>
      %46 = arith.truncf %45 : vector<16x256xf32> to vector<16x256xbf16>
      %c0_25 = arith.constant 0 : index
      %c0_26 = arith.constant 0 : index
      %47 = vector.load %arg7[%c0_25, %c0_26] : memref<16x256xbf16, #tpu.memory_space<vmem>>, vector<16x256xbf16>
      tpu.vector_store %arg7[%c0_25, %c0_26], %46 {strides = array<i32>} : memref<16x256xbf16, #tpu.memory_space<vmem>>, vector<16x256xbf16>,
    } else {
    }
    return
  }
  func.func @transform_0(%arg0: i32, %arg1: i32) -> (i32, i32) {
    %c0_i32 = arith.constant 0 : i32
    %c0_i32_0 = arith.constant 0 : i32
    return %c0_i32, %arg1 : i32, i32
  }
  func.func @transform_1(%arg0: i32, %arg1: i32) -> (i32, i32) {
    %c0_i32 = arith.constant 0 : i32
    %c0_i32_0 = arith.constant 0 : i32
    return %c0_i32, %arg1 : i32, i32
  }
  func.func @transform_2(%arg0: i32, %arg1: i32) -> (i32, i32) {
    %c0_i32 = arith.constant 0 : i32
    %c0_i32_0 = arith.constant 0 : i32
    return %c0_i32, %arg1 : i32, i32
  }
  func.func @transform_3(%arg0: i32, %arg1: i32) -> (i32, i32) {
    %c0_i32 = arith.constant 0 : i32
    return %arg1, %arg0 : i32, i32
  }
  func.func @transform_4(%arg0: i32, %arg1: i32) -> (i32, i32) {
    %c0_i32 = arith.constant 0 : i32
    %c0_i32_0 = arith.constant 0 : i32
    return %c0_i32, %arg0 : i32, i32
  }
  func.func @transform_5(%arg0: i32, %arg1: i32) -> (i32, i32) {
    %c0_i32 = arith.constant 0 : i32
    %c0_i32_0 = arith.constant 0 : i32
    return %c0_i32, %arg0 : i32, i32
  }
}

</mosaic_0001>

<llo_original>
// kernel: discriminator_forward.4
$region0: #{discriminator_forward.4}
  #allocation0 [shape = 'u32[]', space=smem, size = 0x4, offset = 0x4, fixed_abs, tag = 'smem constant byte address 0x4 - core index']
  #allocation1 [shape = 'u32[144,128]{1,0:T(1,128)}', space=vmem, size = 0x12000, scoped, tag = 'internal scratch']
  #allocation2 [shape = 'f32[16,256]{1,0:T(8,128)}', space=vmem, size = 0x4000, scoped, tag = 'scratch operand']
  %s0 = inlined_call_operand.vmem [shape: bf16[16,128], index: 0, kind: input, shape index: {}]
  %s1 = inlined_call_operand.vmem [shape: f32[1,128], index: 1, kind: input, shape index: {}]
  %s2 = inlined_call_operand.vmem [shape: f32[1,128], index: 2, kind: input, shape index: {}]
  %s3 = inlined_call_operand.hbm [shape: bf16[128,256], index: 3, kind: input, shape index: {}]
  %s4 = inlined_call_operand.hbm [shape: f32[1,256], index: 4, kind: input, shape index: {}]
  %s5 = inlined_call_operand.vmem [shape: bf16[16,256], index: 5, kind: output, shape index: {}]
  %s6 = sld [smem:[#allocation0]]
  $region46: #{discriminator_forward.4} parent=0
    _
  %s8 = ssub.s32 1, %s6
  %s9 = scalar_select 0, %s8, %s6
  $region1: #{discriminator_forward.4} parent=0
    #allocation3 [shape = 'u8[65536]{0}', space=vmem, size = 0x10000, scoped, tag = 'input window, operand 3, single buffered']
    #allocation4 [shape = 's32[1]{0}', space=sflag, size = 0x4, scoped, tag = 'scoped memory for discriminator_forward.4']
    #allocation5 [shape = 'u8[1024]{0}', space=vmem, size = 0x400, scoped, tag = 'input window, operand 4, single buffered']
    #allocation6 [shape = 's32[1]{0}', space=sflag, size = 0x4, scoped, tag = 'scoped memory for discriminator_forward.4']
    %10 = vsyncpa [#allocation4], 0
    %11 = vsyncpa [#allocation6], 0
    // Predicated region
    $region2: #{discriminator_forward.4} parent=1 // pred_check
      _
    $region3: #{discriminator_forward.4} parent=1 // pred_check_branch
      %13 = sbr.rel (0) target = $region5
    $region4: #{discriminator_forward.4} parent=1 // pred_region
      _
    $region5: #{discriminator_forward.4} parent=1 // pred_fallthru
      _
    // Predicated region
    $region6: #{discriminator_forward.4} parent=1 // pred_check
      _
    $region7: #{discriminator_forward.4} parent=1 // pred_check_branch
      %15 = sbr.rel (0) target = $region9
    $region8: #{discriminator_forward.4} parent=1 // pred_region
      _
    $region9: #{discriminator_forward.4} parent=1 // pred_fallthru
      _
    // Predicated region
    $region10: #{discriminator_forward.4} parent=1 // pred_check
      _
    $region11: #{discriminator_forward.4} parent=1 // pred_check_branch
      %17 = sbr.rel (0) target = $region13
    $region12: #{discriminator_forward.4} parent=1 // pred_region
      _
    $region13: #{discriminator_forward.4} parent=1 // pred_fallthru
      _
    // Predicated region
    $region14: #{discriminator_forward.4} parent=1 // pred_check
      _
    $region15: #{discriminator_forward.4} parent=1 // pred_check_branch
      %19 = sbr.rel (0) target = $region17
    $region16: #{discriminator_forward.4} parent=1 // pred_region
      %s21 = ssub.s32 2048, 2048
      %22 = vsyncadd [#allocation4], %s21
      %s23 = sshll.u32 [#allocation3], 4
      %s24 = int_to_ptr.vmem [resolvable:$true] %s23
      %29 = dma.hbm_to_vmem [thread:$0]  %s3, 2048, %s24, [#allocation4], 128, 128, 8
    $region17: #{discriminator_forward.4} parent=1 // pred_fallthru
      _
    // Predicated region
    $region18: #{discriminator_forward.4} parent=1 // pred_check
      _
    $region19: #{discriminator_forward.4} parent=1 // pred_check_branch
      %31 = sbr.rel (0) target = $region21
    $region20: #{discriminator_forward.4} parent=1 // pred_region
      %s33 = ssub.s32 32, 32
      %34 = vsyncadd [#allocation6], %s33
      %s36 = sshll.u32 [#allocation5], 4
      %s37 = int_to_ptr.vmem [resolvable:$true] %s36
      %39 = dma.hbm_to_vmem [thread:$0]  %s4, 32, %s37, [#allocation6]
    $region21: #{discriminator_forward.4} parent=1 // pred_fallthru
      _
    // Predicated region
    $region22: #{discriminator_forward.4} parent=1 // pred_check
      _
    $region23: #{discriminator_forward.4} parent=1 // pred_check_branch
      %41 = sbr.rel (0) target = $region25
    $region24: #{discriminator_forward.4} parent=1 // pred_region
      %42 = dma.done [#allocation4], 2048
    $region25: #{discriminator_forward.4} parent=1 // pred_fallthru
      _
    // Predicated region
    $region26: #{discriminator_forward.4} parent=1 // pred_check
      _
    $region27: #{discriminator_forward.4} parent=1 // pred_check_branch
      %44 = sbr.rel (0) target = $region29
    $region28: #{discriminator_forward.4} parent=1 // pred_region
      %45 = dma.done [#allocation6], 32
    $region29: #{discriminator_forward.4} parent=1 // pred_fallthru
      _
    %p47 = scmp.eq.s32.totalorder 0, 0
    // Predicated region
    $region30: #{discriminator_forward.4} parent=1 // pred_check
      %p48 = pneg %p47
    $region31: #{discriminator_forward.4} parent=1 // pred_check_branch
      %50 = sbr.rel (%p48) target = $region33
    $region32: #{discriminator_forward.4} parent=1 // pred_region
      %51 = vst [vmem:[#allocation2] sm:$0xff] 0.0
      %52 = vst [vmem:[#allocation2 + $0x8] sm:$0xff] 0.0
      %53 = vst [vmem:[#allocation2 + $0x10] sm:$0xff] 0.0
      %54 = vst [vmem:[#allocation2 + $0x18] sm:$0xff] 0.0
    $region33: #{discriminator_forward.4} parent=1 // pred_fallthru
      _
    %v55 = vld [vmem:[%s0] sm:$0xf]
    %v56 = vld [vmem:[%s0 + $0x4] sm:$0xf]
    %v57 = vld [vmem:[#allocation2] sm:$0xff]
    %v58 = vld [vmem:[#allocation2 + $0x8] sm:$0xff]
    %v59 = vld [vmem:[#allocation2 + $0x10] sm:$0xff]
    %v60 = vld [vmem:[#allocation2 + $0x18] sm:$0xff]
    %v61 = vld [vmem:[#allocation3] sm:$0xff]
    %v62 = vld [vmem:[#allocation3 + $0x8] sm:$0xff]
    %v63 = vld [vmem:[#allocation3 + $0x10] sm:$0xff]
    %v64 = vld [vmem:[#allocation3 + $0x18] sm:$0xff]
    %v65 = vld [vmem:[#allocation3 + $0x20] sm:$0xff]
    %v66 = vld [vmem:[#allocation3 + $0x28] sm:$0xff]
    %v67 = vld [vmem:[#allocation3 + $0x30] sm:$0xff]
    %v68 = vld [vmem:[#allocation3 + $0x38] sm:$0xff]
    %v69 = vld [vmem:[#allocation3 + $0x40] sm:$0xff]
    %v70 = vld [vmem:[#allocation3 + $0x48] sm:$0xff]
    %v71 = vld [vmem:[#allocation3 + $0x50] sm:$0xff]
    %v72 = vld [vmem:[#allocation3 + $0x58] sm:$0xff]
    %v73 = vld [vmem:[#allocation3 + $0x60] sm:$0xff]
    %v74 = vld [vmem:[#allocation3 + $0x68] sm:$0xff]
    %v75 = vld [vmem:[#allocation3 + $0x70] sm:$0xff]
    %v76 = vld [vmem:[#allocation3 + $0x78] sm:$0xff]
    %v79 = vunpack.c.l.b16 %v55
    %v80 = vunpack.c.l.b16 %v56
    %v81 = vpack.c.b16 %v80, %v79
    %v99 = vunpack.c.l.b16 %v61
    %v100 = vunpack.c.h.b16 %v61
    %v101 = vunpack.c.l.b16 %v62
    %v102 = vunpack.c.h.b16 %v62
    %v103 = vunpack.c.l.b16 %v63
    %v104 = vunpack.c.h.b16 %v63
    %v105 = vunpack.c.l.b16 %v64
    %v106 = vunpack.c.h.b16 %v64
    %v107 = vunpack.c.l.b16 %v65
    %v108 = vunpack.c.h.b16 %v65
    %v109 = vunpack.c.l.b16 %v66
    %v110 = vunpack.c.h.b16 %v66
    %v111 = vunpack.c.l.b16 %v67
    %v112 = vunpack.c.h.b16 %v67
    %v113 = vunpack.c.l.b16 %v68
    %v114 = vunpack.c.h.b16 %v68
    %v115 = vunpack.c.l.b16 %v69
    %v116 = vunpack.c.h.b16 %v69
    %v117 = vunpack.c.l.b16 %v70
    %v118 = vunpack.c.h.b16 %v70
    %v119 = vunpack.c.l.b16 %v71
    %v120 = vunpack.c.h.b16 %v71
    %v121 = vunpack.c.l.b16 %v72
    %v122 = vunpack.c.h.b16 %v72
    %v123 = vunpack.c.l.b16 %v73
    %v124 = vunpack.c.h.b16 %v73
    %v125 = vunpack.c.l.b16 %v74
    %v126 = vunpack.c.h.b16 %v74
    %v127 = vunpack.c.l.b16 %v75
    %v128 = vunpack.c.h.b16 %v75
    %v129 = vunpack.c.l.b16 %v76
    %v130 = vunpack.c.h.b16 %v76
    %v131 = vpack.c.b16 %v101, %v99
    %v132 = vpack.c.b16 %v102, %v100
    %v133 = vpack.c.b16 %v105, %v103
    %v134 = vpack.c.b16 %v106, %v104
    %v135 = vpack.c.b16 %v109, %v107
    %v136 = vpack.c.b16 %v110, %v108
    %v137 = vpack.c.b16 %v113, %v111
    %v138 = vpack.c.b16 %v114, %v112
    %v139 = vpack.c.b16 %v117, %v115
    %v140 = vpack.c.b16 %v118, %v116
    %v141 = vpack.c.b16 %v121, %v119
    %v142 = vpack.c.b16 %v122, %v120
    %v143 = vpack.c.b16 %v125, %v123
    %v144 = vpack.c.b16 %v126, %v124
    %v145 = vpack.c.b16 %v129, %v127
    %v146 = vpack.c.b16 %v130, %v128
    %163 = vmatprep.subr.bf16.mxu0 %v146
    %164 = vmatpush1.bf16.msra.mxu0 %v145
    %165 = vmatprep.subr.bf16.mxu0 %v144
    %166 = vmatpush1.bf16.msra.mxu0 %v143
    %167 = vmatprep.subr.bf16.mxu0 %v142
    %168 = vmatpush1.bf16.msra.mxu0 %v141
    %169 = vmatprep.subr.bf16.mxu0 %v140
    %170 = vmatpush1.bf16.msra.mxu0 %v139
    %171 = vmatprep.subr.bf16.mxu0 %v138
    %172 = vmatpush1.bf16.msra.mxu0 %v137
    %173 = vmatprep.subr.bf16.mxu0 %v136
    %174 = vmatpush1.bf16.msra.mxu0 %v135
    %175 = vmatprep.subr.bf16.mxu0 %v134
    %176 = vmatpush1.bf16.msra.mxu0 %v133
    %177 = vmatprep.subr.bf16.mxu0 %v132
    %178 = vmatpush1.bf16.msra.mxu0 %v131
    %179 = vmatprep.subr.bf16.mxu0 0
    %180 = vmatpush2.bf16.msra.mxu0 0
    %181 = vmatprep.subr.bf16.mxu0 0
    %182 = vmatpush2.bf16.msra.mxu0 0
    %183 = vmatprep.subr.bf16.mxu0 0
    %184 = vmatpush2.bf16.msra.mxu0 0
    %185 = vmatprep.subr.bf16.mxu0 0
    %186 = vmatpush2.bf16.msra.mxu0 0
    %187 = vmatprep.subr.bf16.mxu0 0
    %188 = vmatpush2.bf16.msra.mxu0 0
    %189 = vmatprep.subr.bf16.mxu0 0
    %190 = vmatpush2.bf16.msra.mxu0 0
    %191 = vmatprep.subr.bf16.mxu0 0
    %192 = vmatpush2.bf16.msra.mxu0 0
    %193 = vmatprep.subr.bf16.mxu0 0
    %194 = vmatpush2.bf16.msra.mxu0 0
    %195 = vmatprep.mubr.bf16.mxu0 0
    %196 = vmatmul.mubr.bf16.gmra.mxu0 %v81
    %v197 = vpop.f32.mrf.mxu0
    %v198 = vadd.f32 0.0, %v197
    %v199 = vpop.f32.mrf.mxu0
    %v200 = vadd.f32 0.0, %v199
    %v201 = vpop.f32.mrf.mxu0
    %v202 = vadd.f32 0.0, %v201
    %v203 = vpop.f32.mrf.mxu0
    %v204 = vadd.f32 0.0, %v203
    %205 = vdwg.mxu0
    %v206 = vadd.f32 %v57, %v198
    %v207 = vadd.f32 %v58, %v200
    %v208 = vadd.f32 %v59, %v202
    %v209 = vadd.f32 %v60, %v204
    %210 = vst [vmem:[#allocation2] sm:$0xff] %v206
    %211 = vst [vmem:[#allocation2 + $0x8] sm:$0xff] %v207
    %212 = vst [vmem:[#allocation2 + $0x10] sm:$0xff] %v208
    %213 = vst [vmem:[#allocation2 + $0x18] sm:$0xff] %v209
    // Predicated region
    $region34: #{discriminator_forward.4} parent=1 // pred_check
      %p214 = pneg %p47
    $region35: #{discriminator_forward.4} parent=1 // pred_check_branch
      %216 = sbr.rel (%p214) target = $region37
    $region36: #{discriminator_forward.4} parent=1 // pred_region
      %v217 = vld [vmem:[#allocation2] sm:$0xff]
      %v218 = vld [vmem:[#allocation2 + $0x8] sm:$0xff]
      %v219 = vld [vmem:[#allocation2 + $0x10] sm:$0xff]
      %v220 = vld [vmem:[#allocation2 + $0x18] sm:$0xff]
      %v221 = vld [vmem:[#allocation5] sm:$0x3]
      %v223 = vlaneseq
      %v224 = vshrl.u32 %v223, 7
      %v225 = vsub.s32 0, %v224
      %v226 = vrot.slane %v221, %v225
      %v227 = vlaneseq
      %v228 = vshrl.u32 %v227, 7
      %v229 = vsub.s32 1, %v228
      %v230 = vrot.slane %v221, %v229
      %v233 = vadd.f32 %v217, %v226
      %v234 = vadd.f32 %v218, %v230
      %v235 = vadd.f32 %v219, %v226
      %v236 = vadd.f32 %v220, %v230
      %v237 = vpack.c.bf16 %v235, %v233
      %v238 = vpack.c.bf16 %v236, %v234
      %v241 = vunpack.c.l.b16 %v237
      %v242 = vunpack.c.l.b16 %v238
      %v243 = vunpack.c.h.b16 %v237
      %v244 = vunpack.c.h.b16 %v238
      %v245 = vpack.c.b16 %v242, %v241
      %v246 = vpack.c.b16 %v244, %v243
      %249 = vst [vmem:[%s5] sm:$0xff] %v245
      %250 = vst [vmem:[%s5 + $0x8] sm:$0xff] %v246
    $region37: #{discriminator_forward.4} parent=1 // pred_fallthru
      _
    // Predicated region
    $region38: #{discriminator_forward.4} parent=1 // pred_check
      _
    $region39: #{discriminator_forward.4} parent=1 // pred_check_branch
      %252 = sbr.rel (0) target = $region41
    $region40: #{discriminator_forward.4} parent=1 // pred_region
      _
    $region41: #{discriminator_forward.4} parent=1 // pred_fallthru
      _
    // Predicated region
    $region42: #{discriminator_forward.4} parent=1 // pred_check
      _
    $region43: #{discriminator_forward.4} parent=1 // pred_check_branch
      %254 = sbr.rel (0) target = $region45
    $region44: #{discriminator_forward.4} parent=1 // pred_region
      _
    $region45: #{discriminator_forward.4} parent=1 // pred_fallthru
      _
    %255 = vsyncpa [#allocation4], 1
    %256 = vsyncpa [#allocation6], 1

// kernel: discriminator_forward.5
$region0: #{discriminator_forward.5}
  #allocation0 [shape = 'u32[]', space=smem, size = 0x4, offset = 0x4, fixed_abs, tag = 'smem constant byte address 0x4 - core index']
  #allocation1 [shape = 'u32[144,128]{1,0:T(1,128)}', space=vmem, size = 0x12000, scoped, tag = 'internal scratch']
  #allocation2 [shape = 'f32[16,256]{1,0:T(8,128)}', space=vmem, size = 0x4000, scoped, tag = 'scratch operand']
  %s0 = inlined_call_operand.vmem [shape: bf16[16,256], index: 0, kind: input, shape index: {}]
  %s1 = inlined_call_operand.hbm [shape: f32[1,256], index: 1, kind: input, shape index: {}]
  %s2 = inlined_call_operand.hbm [shape: f32[1,256], index: 2, kind: input, shape index: {}]
  %s3 = inlined_call_operand.hbm [shape: bf16[256,256], index: 3, kind: input, shape index: {}]
  %s4 = inlined_call_operand.hbm [shape: f32[1,256], index: 4, kind: input, shape index: {}]
  %s5 = inlined_call_operand.vmem [shape: bf16[16,256], index: 5, kind: output, shape index: {}]
  %s6 = sld [smem:[#allocation0]]
  $region54: #{discriminator_forward.5} parent=0
    _
  %s8 = ssub.s32 1, %s6
  %s9 = scalar_select 0, %s8, %s6
  $region1: #{discriminator_forward.5} parent=0
    #allocation3 [shape = 'u8[1024]{0}', space=vmem, size = 0x400, scoped, tag = 'input window, operand 1, single buffered']
    #allocation4 [shape = 's32[1]{0}', space=sflag, size = 0x4, scoped, tag = 'scoped memory for discriminator_forward.5']
    #allocation5 [shape = 'u8[1024]{0}', space=vmem, size = 0x400, scoped, tag = 'input window, operand 2, single buffered']
    #allocation6 [shape = 's32[1]{0}', space=sflag, size = 0x4, scoped, tag = 'scoped memory for discriminator_forward.5']
    #allocation7 [shape = 'u8[131072]{0}', space=vmem, size = 0x20000, scoped, tag = 'input window, operand 3, single buffered']
    #allocation8 [shape = 'u8[1024]{0}', space=vmem, size = 0x400, scoped, tag = 'input window, operand 4, single buffered']
    #allocation9 [shape = 's32[1]{0}', space=sflag, size = 0x4, scoped, tag = 'scoped memory for discriminator_forward.5']
    %10 = vsyncpa [#allocation4], 0
    %11 = vsyncpa [#allocation6], 0
    %12 = vsyncpa [#allocation9], 0
    // Predicated region
    $region2: #{discriminator_forward.5} parent=1 // pred_check
      _
    $region3: #{discriminator_forward.5} parent=1 // pred_check_branch
      %14 = sbr.rel (0) target = $region5
    $region4: #{discriminator_forward.5} parent=1 // pred_region
      _
    $region5: #{discriminator_forward.5} parent=1 // pred_fallthru
      _
    // Predicated region
    $region6: #{discriminator_forward.5} parent=1 // pred_check
      _
    $region7: #{discriminator_forward.5} parent=1 // pred_check_branch
      %16 = sbr.rel (0) target = $region9
    $region8: #{discriminator_forward.5} parent=1 // pred_region
      %s18 = ssub.s32 32, 32
      %19 = vsyncadd [#allocation4], %s18
      %s21 = sshll.u32 [#allocation3], 4
      %s22 = int_to_ptr.vmem [resolvable:$true] %s21
      %24 = dma.hbm_to_vmem [thread:$0]  %s1, 32, %s22, [#allocation4]
    $region9: #{discriminator_forward.5} parent=1 // pred_fallthru
      _
    // Predicated region
    $region10: #{discriminator_forward.5} parent=1 // pred_check
      _
    $region11: #{discriminator_forward.5} parent=1 // pred_check_branch
      %26 = sbr.rel (0) target = $region13
    $region12: #{discriminator_forward.5} parent=1 // pred_region
      %s28 = ssub.s32 32, 32
      %29 = vsyncadd [#allocation6], %s28
      %s31 = sshll.u32 [#allocation5], 4
      %s32 = int_to_ptr.vmem [resolvable:$true] %s31
      %34 = dma.hbm_to_vmem [thread:$0]  %s2, 32, %s32, [#allocation6]
    $region13: #{discriminator_forward.5} parent=1 // pred_fallthru
      _
    // Predicated region
    $region14: #{discriminator_forward.5} parent=1 // pred_check
      _
    $region15: #{discriminator_forward.5} parent=1 // pred_check_branch
      %36 = sbr.rel (0) target = $region17
    $region16: #{discriminator_forward.5} parent=1 // pred_region
      %s38 = ssub.s32 4096, 4096
      %39 = vsyncadd [#allocation6], %s38
      %s40 = sshll.u32 [#allocation7], 4
      %s41 = int_to_ptr.vmem [resolvable:$true] %s40
      %46 = dma.hbm_to_vmem [thread:$0]  %s3, 4096, %s41, [#allocation6], 128, 128, 8
    $region17: #{discriminator_forward.5} parent=1 // pred_fallthru
      _
    // Predicated region
    $region18: #{discriminator_forward.5} parent=1 // pred_check
      _
    $region19: #{discriminator_forward.5} parent=1 // pred_check_branch
      %48 = sbr.rel (0) target = $region21
    $region20: #{discriminator_forward.5} parent=1 // pred_region
      %s50 = ssub.s32 32, 32
      %51 = vsyncadd [#allocation9], %s50
      %s53 = sshll.u32 [#allocation8], 4
      %s54 = int_to_ptr.vmem [resolvable:$true] %s53
      %56 = dma.hbm_to_vmem [thread:$0]  %s4, 32, %s54, [#allocation9]
    $region21: #{discriminator_forward.5} parent=1 // pred_fallthru
      _
    // Predicated region
    $region22: #{discriminator_forward.5} parent=1 // pred_check
      _
    $region23: #{discriminator_forward.5} parent=1 // pred_check_branch
      %58 = sbr.rel (0) target = $region25
    $region24: #{discriminator_forward.5} parent=1 // pred_region
      %59 = dma.done [#allocation4], 32
    $region25: #{discriminator_forward.5} parent=1 // pred_fallthru
      _
    // Predicated region
    $region26: #{discriminator_forward.5} parent=1 // pred_check
      _
    $region27: #{discriminator_forward.5} parent=1 // pred_check_branch
      %61 = sbr.rel (0) target = $region29
    $region28: #{discriminator_forward.5} parent=1 // pred_region
      %62 = dma.done [#allocation6], 32
    $region29: #{discriminator_forward.5} parent=1 // pred_fallthru
      _
    // Predicated region
    $region30: #{discriminator_forward.5} parent=1 // pred_check
      _
    $region31: #{discriminator_forward.5} parent=1 // pred_check_branch
      %64 = sbr.rel (0) target = $region33
    $region32: #{discriminator_forward.5} parent=1 // pred_region
      %65 = dma.done [#allocation6], 4096
    $region33: #{discriminator_forward.5} parent=1 // pred_fallthru
      _
    // Predicated region
    $region34: #{discriminator_forward.5} parent=1 // pred_check
      _
    $region35: #{discriminator_forward.5} parent=1 // pred_check_branch
      %67 = sbr.rel (0) target = $region37
    $region36: #{discriminator_forward.5} parent=1 // pred_region
      %68 = dma.done [#allocation9], 32
    $region37: #{discriminator_forward.5} parent=1 // pred_fallthru
      _
    %p69 = scmp.eq.s32.totalorder 0, 0
    // Predicated region
    $region38: #{discriminator_forward.5} parent=1 // pred_check
      %p70 = pneg %p69
    $region39: #{discriminator_forward.5} parent=1 // pred_check_branch
      %72 = sbr.rel (%p70) target = $region41
    $region40: #{discriminator_forward.5} parent=1 // pred_region
      %73 = vst [vmem:[#allocation2] sm:$0xff] 0.0
      %74 = vst [vmem:[#allocation2 + $0x8] sm:$0xff] 0.0
      %75 = vst [vmem:[#allocation2 + $0x10] sm:$0xff] 0.0
      %76 = vst [vmem:[#allocation2 + $0x18] sm:$0xff] 0.0
    $region41: #{discriminator_forward.5} parent=1 // pred_fallthru
      _
    %v77 = vld [vmem:[%s0] sm:$0xff]
    %v78 = vld [vmem:[%s0 + $0x8] sm:$0xff]
    %v79 = vunpack.c.l.bf16 %v77
    %v80 = vunpack.c.h.bf16 %v77
    %v81 = vunpack.c.l.bf16 %v78
    %v82 = vunpack.c.h.bf16 %v78
    %v83 = vadd.f32 %v79, %v81
    %v84 = vrot.slane %v83, 4
    %v85 = vadd.f32 %v83, %v84
    %v86 = vrot.slane %v85, 2
    %v87 = vadd.f32 %v85, %v86
    %v88 = vrot.slane %v87, 1
    %v89 = vadd.f32 %v87, %v88
    %v90 = vadd.f32 %v80, %v82
    %v91 = vrot.slane %v90, 4
    %v92 = vadd.f32 %v90, %v91
    %v93 = vrot.slane %v92, 2
    %v94 = vadd.f32 %v92, %v93
    %v95 = vrot.slane %v94, 1
    %v96 = vadd.f32 %v94, %v95
    %v97 = vmul.f32 %v79, %v79
    %v98 = vmul.f32 %v80, %v80
    %v99 = vmul.f32 %v81, %v81
    %v100 = vmul.f32 %v82, %v82
    %v101 = vadd.f32 %v97, %v99
    %v102 = vrot.slane %v101, 4
    %v103 = vadd.f32 %v101, %v102
    %v104 = vrot.slane %v103, 2
    %v105 = vadd.f32 %v103, %v104
    %v106 = vrot.slane %v105, 1
    %v107 = vadd.f32 %v105, %v106
    %v108 = vadd.f32 %v98, %v100
    %v109 = vrot.slane %v108, 4
    %v110 = vadd.f32 %v108, %v109
    %v111 = vrot.slane %v110, 2
    %v112 = vadd.f32 %v110, %v111
    %v113 = vrot.slane %v112, 1
    %v114 = vadd.f32 %v112, %v113
    %v115 = vmul.f32 %v89, 0.0625
    %v116 = vmul.f32 %v96, 0.0625
    %v117 = vmul.f32 %v107, 0.0625
    %v118 = vmul.f32 %v114, 0.0625
    %v119 = vmul.f32 %v115, %v115
    %v120 = vmul.f32 %v116, %v116
    %v121 = vsub.f32 %v117, %v119
    %v122 = vsub.f32 %v118, %v120
    %v123 = vmax.f32 %v121, 0.0
    %v124 = vmax.f32 %v122, 0.0
    %v125 = vsub.f32 %v79, %v115
    %v126 = vsub.f32 %v80, %v116
    %v127 = vsub.f32 %v81, %v115
    %v128 = vsub.f32 %v82, %v116
    %v129 = vadd.f32 %v123, 1e-05
    %v130 = vadd.f32 %v124, 1e-05
    %v131 = vrsqrt.pop %v129
    %v132 = vrsqrt.pop %v130
    %v133 = vmul.f32 %v125, %v131
    %v134 = vmul.f32 %v126, %v132
    %v135 = vmul.f32 %v127, %v131
    %v136 = vmul.f32 %v128, %v132
    %v137 = vld [vmem:[#allocation3] sm:$0x3]
    %v139 = vlaneseq
    %v140 = vshrl.u32 %v139, 7
    %v141 = vsub.s32 0, %v140
    %v142 = vrot.slane %v137, %v141
    %v143 = vlaneseq
    %v144 = vshrl.u32 %v143, 7
    %v145 = vsub.s32 1, %v144
    %v146 = vrot.slane %v137, %v145
    %v149 = vmul.f32 %v133, %v142
    %v150 = vmul.f32 %v134, %v146
    %v151 = vmul.f32 %v135, %v142
    %v152 = vmul.f32 %v136, %v146
    %v153 = vld [vmem:[#allocation5] sm:$0x3]
    %v155 = vlaneseq
    %v156 = vshrl.u32 %v155, 7
    %v157 = vsub.s32 0, %v156
    %v158 = vrot.slane %v153, %v157
    %v159 = vlaneseq
    %v160 = vshrl.u32 %v159, 7
    %v161 = vsub.s32 1, %v160
    %v162 = vrot.slane %v153, %v161
    %v165 = vadd.f32 %v149, %v158
    %v166 = vadd.f32 %v150, %v162
    %v167 = vadd.f32 %v151, %v158
    %v168 = vadd.f32 %v152, %v162
    %v169 = vmax.f32 %v165, 0.0
    %v170 = vmax.f32 %v166, 0.0
    %v171 = vmax.f32 %v167, 0.0
    %v172 = vmax.f32 %v168, 0.0
    %v173 = vld [vmem:[#allocation2] sm:$0xff]
    %v174 = vld [vmem:[#allocation2 + $0x8] sm:$0xff]
    %v175 = vld [vmem:[#allocation2 + $0x10] sm:$0xff]
    %v176 = vld [vmem:[#allocation2 + $0x18] sm:$0xff]
    %v177 = vpack.c.bf16 %v171, %v169
    %v178 = vpack.c.bf16 %v172, %v170
    %v179 = vld [vmem:[#allocation7] sm:$0xff]
    %v180 = vld [vmem:[#allocation7 + $0x8] sm:$0xff]
    %v181 = vld [vmem:[#allocation7 + $0x10] sm:$0xff]
    %v182 = vld [vmem:[#allocation7 + $0x18] sm:$0xff]
    %v183 = vld [vmem:[#allocation7 + $0x20] sm:$0xff]
    %v184 = vld [vmem:[#allocation7 + $0x28] sm:$0xff]
    %v185 = vld [vmem:[#allocation7 + $0x30] sm:$0xff]
    %v186 = vld [vmem:[#allocation7 + $0x38] sm:$0xff]
    %v187 = vld [vmem:[#allocation7 + $0x40] sm:$0xff]
    %v188 = vld [vmem:[#allocation7 + $0x48] sm:$0xff]
    %v189 = vld [vmem:[#allocation7 + $0x50] sm:$0xff]
    %v190 = vld [vmem:[#allocation7 + $0x58] sm:$0xff]
    %v191 = vld [vmem:[#allocation7 + $0x60] sm:$0xff]
    %v192 = vld [vmem:[#allocation7 + $0x68] sm:$0xff]
    %v193 = vld [vmem:[#allocation7 + $0x70] sm:$0xff]
    %v194 = vld [vmem:[#allocation7 + $0x78] sm:$0xff]
    %v195 = vld [vmem:[#allocation7 + $0x80] sm:$0xff]
    %v196 = vld [vmem:[#allocation7 + $0x88] sm:$0xff]
    %v197 = vld [vmem:[#allocation7 + $0x90] sm:$0xff]
    %v198 = vld [vmem:[#allocation7 + $0x98] sm:$0xff]
    %v199 = vld [vmem:[#allocation7 + $0xa0] sm:$0xff]
    %v200 = vld [vmem:[#allocation7 + $0xa8] sm:$0xff]
    %v201 = vld [vmem:[#allocation7 + $0xb0] sm:$0xff]
    %v202 = vld [vmem:[#allocation7 + $0xb8] sm:$0xff]
    %v203 = vld [vmem:[#allocation7 + $0xc0] sm:$0xff]
    %v204 = vld [vmem:[#allocation7 + $0xc8] sm:$0xff]
    %v205 = vld [vmem:[#allocation7 + $0xd0] sm:$0xff]
    %v206 = vld [vmem:[#allocation7 + $0xd8] sm:$0xff]
    %v207 = vld [vmem:[#allocation7 + $0xe0] sm:$0xff]
    %v208 = vld [vmem:[#allocation7 + $0xe8] sm:$0xff]
    %v209 = vld [vmem:[#allocation7 + $0xf0] sm:$0xff]
    %v210 = vld [vmem:[#allocation7 + $0xf8] sm:$0xff]
    %v243 = vunpack.c.l.b16 %v179
    %v244 = vunpack.c.h.b16 %v179
    %v245 = vunpack.c.l.b16 %v180
    %v246 = vunpack.c.h.b16 %v180
    %v247 = vunpack.c.l.b16 %v181
    %v248 = vunpack.c.h.b16 %v181
    %v249 = vunpack.c.l.b16 %v182
    %v250 = vunpack.c.h.b16 %v182
    %v251 = vunpack.c.l.b16 %v183
    %v252 = vunpack.c.h.b16 %v183
    %v253 = vunpack.c.l.b16 %v184
    %v254 = vunpack.c.h.b16 %v184
    %v255 = vunpack.c.l.b16 %v185
    %v256 = vunpack.c.h.b16 %v185
    %v257 = vunpack.c.l.b16 %v186
    %v258 = vunpack.c.h.b16 %v186
    %v259 = vunpack.c.l.b16 %v187
    %v260 = vunpack.c.h.b16 %v187
    %v261 = vunpack.c.l.b16 %v188
    %v262 = vunpack.c.h.b16 %v188
    %v263 = vunpack.c.l.b16 %v189
    %v264 = vunpack.c.h.b16 %v189
    %v265 = vunpack.c.l.b16 %v190
    %v266 = vunpack.c.h.b16 %v190
    %v267 = vunpack.c.l.b16 %v191
    %v268 = vunpack.c.h.b16 %v191
    %v269 = vunpack.c.l.b16 %v192
    %v270 = vunpack.c.h.b16 %v192
    %v271 = vunpack.c.l.b16 %v193
    %v272 = vunpack.c.h.b16 %v193
    %v273 = vunpack.c.l.b16 %v194
    %v274 = vunpack.c.h.b16 %v194
    %v275 = vunpack.c.l.b16 %v195
    %v276 = vunpack.c.h.b16 %v195
    %v277 = vunpack.c.l.b16 %v196
    %v278 = vunpack.c.h.b16 %v196
    %v279 = vunpack.c.l.b16 %v197
    %v280 = vunpack.c.h.b16 %v197
    %v281 = vunpack.c.l.b16 %v198
    %v282 = vunpack.c.h.b16 %v198
    %v283 = vunpack.c.l.b16 %v199
    %v284 = vunpack.c.h.b16 %v199
    %v285 = vunpack.c.l.b16 %v200
    %v286 = vunpack.c.h.b16 %v200
    %v287 = vunpack.c.l.b16 %v201
    %v288 = vunpack.c.h.b16 %v201
    %v289 = vunpack.c.l.b16 %v202
    %v290 = vunpack.c.h.b16 %v202
    %v291 = vunpack.c.l.b16 %v203
    %v292 = vunpack.c.h.b16 %v203
    %v293 = vunpack.c.l.b16 %v204
    %v294 = vunpack.c.h.b16 %v204
    %v295 = vunpack.c.l.b16 %v205
    %v296 = vunpack.c.h.b16 %v205
    %v297 = vunpack.c.l.b16 %v206
    %v298 = vunpack.c.h.b16 %v206
    %v299 = vunpack.c.l.b16 %v207
    %v300 = vunpack.c.h.b16 %v207
    %v301 = vunpack.c.l.b16 %v208
    %v302 = vunpack.c.h.b16 %v208
    %v303 = vunpack.c.l.b16 %v209
    %v304 = vunpack.c.h.b16 %v209
    %v305 = vunpack.c.l.b16 %v210
    %v306 = vunpack.c.h.b16 %v210
    %v307 = vpack.c.b16 %v245, %v243
    %v308 = vpack.c.b16 %v246, %v244
    %v309 = vpack.c.b16 %v249, %v247
    %v310 = vpack.c.b16 %v250, %v248
    %v311 = vpack.c.b16 %v253, %v251
    %v312 = vpack.c.b16 %v254, %v252
    %v313 = vpack.c.b16 %v257, %v255
    %v314 = vpack.c.b16 %v258, %v256
    %v315 = vpack.c.b16 %v261, %v259
    %v316 = vpack.c.b16 %v262, %v260
    %v317 = vpack.c.b16 %v265, %v263
    %v318 = vpack.c.b16 %v266, %v264
    %v319 = vpack.c.b16 %v269, %v267
    %v320 = vpack.c.b16 %v270, %v268
    %v321 = vpack.c.b16 %v273, %v271
    %v322 = vpack.c.b16 %v274, %v272
    %v323 = vpack.c.b16 %v277, %v275
    %v324 = vpack.c.b16 %v278, %v276
    %v325 = vpack.c.b16 %v281, %v279
    %v326 = vpack.c.b16 %v282, %v280
    %v327 = vpack.c.b16 %v285, %v283
    %v328 = vpack.c.b16 %v286, %v284
    %v329 = vpack.c.b16 %v289, %v287
    %v330 = vpack.c.b16 %v290, %v288
    %v331 = vpack.c.b16 %v293, %v291
    %v332 = vpack.c.b16 %v294, %v292
    %v333 = vpack.c.b16 %v297, %v295
    %v334 = vpack.c.b16 %v298, %v296
    %v335 = vpack.c.b16 %v301, %v299
    %v336 = vpack.c.b16 %v302, %v300
    %v337 = vpack.c.b16 %v305, %v303
    %v338 = vpack.c.b16 %v306, %v304
    %371 = vmatprep.subr.bf16.mxu0 %v322
    %372 = vmatpush1.bf16.msra.mxu0 %v321
    %373 = vmatprep.subr.bf16.mxu0 %v320
    %374 = vmatpush1.bf16.msra.mxu0 %v319
    %375 = vmatprep.subr.bf16.mxu0 %v318
    %376 = vmatpush1.bf16.msra.mxu0 %v317
    %377 = vmatprep.subr.bf16.mxu0 %v316
    %378 = vmatpush1.bf16.msra.mxu0 %v315
    %379 = vmatprep.subr.bf16.mxu0 %v314
    %380 = vmatpush1.bf16.msra.mxu0 %v313
    %381 = vmatprep.subr.bf16.mxu0 %v312
    %382 = vmatpush1.bf16.msra.mxu0 %v311
    %383 = vmatprep.subr.bf16.mxu0 %v310
    %384 = vmatpush1.bf16.msra.mxu0 %v309
    %385 = vmatprep.subr.bf16.mxu0 %v308
    %386 = vmatpush1.bf16.msra.mxu0 %v307
    %387 = vmatprep.subr.bf16.mxu0 %v338
    %388 = vmatpush2.bf16.msra.mxu0 %v337
    %389 = vmatprep.subr.bf16.mxu0 %v336
    %390 = vmatpush2.bf16.msra.mxu0 %v335
    %391 = vmatprep.subr.bf16.mxu0 %v334
    %392 = vmatpush2.bf16.msra.mxu0 %v333
    %393 = vmatprep.subr.bf16.mxu0 %v332
    %394 = vmatpush2.bf16.msra.mxu0 %v331
    %395 = vmatprep.subr.bf16.mxu0 %v330
    %396 = vmatpush2.bf16.msra.mxu0 %v329
    %397 = vmatprep.subr.bf16.mxu0 %v328
    %398 = vmatpush2.bf16.msra.mxu0 %v327
    %399 = vmatprep.subr.bf16.mxu0 %v326
    %400 = vmatpush2.bf16.msra.mxu0 %v325
    %401 = vmatprep.subr.bf16.mxu0 %v324
    %402 = vmatpush2.bf16.msra.mxu0 %v323
    %403 = vmatprep.mubr.bf16.mxu0 %v178
    %404 = vmatmul.mubr.bf16.gmra.mxu0 %v177
    %v405 = vpop.f32.mrf.mxu0
    %v406 = vadd.f32 0.0, %v405
    %v407 = vpop.f32.mrf.mxu0
    %v408 = vadd.f32 0.0, %v407
    %v409 = vpop.f32.mrf.mxu0
    %v410 = vadd.f32 0.0, %v409
    %v411 = vpop.f32.mrf.mxu0
    %v412 = vadd.f32 0.0, %v411
    %413 = vdwg.mxu0
    %v414 = vadd.f32 %v173, %v406
    %v415 = vadd.f32 %v174, %v408
    %v416 = vadd.f32 %v175, %v410
    %v417 = vadd.f32 %v176, %v412
    %418 = vst [vmem:[#allocation2] sm:$0xff] %v414
    %419 = vst [vmem:[#allocation2 + $0x8] sm:$0xff] %v415
    %420 = vst [vmem:[#allocation2 + $0x10] sm:$0xff] %v416
    %421 = vst [vmem:[#allocation2 + $0x18] sm:$0xff] %v417
    // Predicated region
    $region42: #{discriminator_forward.5} parent=1 // pred_check
      %p422 = pneg %p69
    $region43: #{discriminator_forward.5} parent=1 // pred_check_branch
      %424 = sbr.rel (%p422) target = $region45
    $region44: #{discriminator_forward.5} parent=1 // pred_region
      %v425 = vld [vmem:[#allocation2] sm:$0xff]
      %v426 = vld [vmem:[#allocation2 + $0x8] sm:$0xff]
      %v427 = vld [vmem:[#allocation2 + $0x10] sm:$0xff]
      %v428 = vld [vmem:[#allocation2 + $0x18] sm:$0xff]
      %v429 = vld [vmem:[#allocation8] sm:$0x3]
      %v431 = vlaneseq
      %v432 = vshrl.u32 %v431, 7
      %v433 = vsub.s32 0, %v432
      %v434 = vrot.slane %v429, %v433
      %v435 = vlaneseq
      %v436 = vshrl.u32 %v435, 7
      %v437 = vsub.s32 1, %v436
      %v438 = vrot.slane %v429, %v437
      %v441 = vadd.f32 %v425, %v434
      %v442 = vadd.f32 %v426, %v438
      %v443 = vadd.f32 %v427, %v434
      %v444 = vadd.f32 %v428, %v438
      %v445 = vpack.c.bf16 %v443, %v441
      %v446 = vpack.c.bf16 %v444, %v442
      %v449 = vunpack.c.l.b16 %v445
      %v450 = vunpack.c.l.b16 %v446
      %v451 = vunpack.c.h.b16 %v445
      %v452 = vunpack.c.h.b16 %v446
      %v453 = vpack.c.b16 %v450, %v449
      %v454 = vpack.c.b16 %v452, %v451
      %457 = vst [vmem:[%s5] sm:$0xff] %v453
      %458 = vst [vmem:[%s5 + $0x8] sm:$0xff] %v454
    $region45: #{discriminator_forward.5} parent=1 // pred_fallthru
      _
    // Predicated region
    $region46: #{discriminator_forward.5} parent=1 // pred_check
      _
    $region47: #{discriminator_forward.5} parent=1 // pred_check_branch
      %460 = sbr.rel (0) target = $region49
    $region48: #{discriminator_forward.5} parent=1 // pred_region
      _
    $region49: #{discriminator_forward.5} parent=1 // pred_fallthru
      _
    // Predicated region
    $region50: #{discriminator_forward.5} parent=1 // pred_check
      _
    $region51: #{discriminator_forward.5} parent=1 // pred_check_branch
      %462 = sbr.rel (0) target = $region53
    $region52: #{discriminator_forward.5} parent=1 // pred_region
      _
    $region53: #{discriminator_forward.5} parent=1 // pred_fallthru
      _
    %463 = vsyncpa [#allocation4], 1
    %464 = vsyncpa [#allocation6], 1
    %465 = vsyncpa [#allocation9], 1

// kernel: discriminator_forward.6
$region0: #{discriminator_forward.6}
  #allocation0 [shape = 'u32[]', space=smem, size = 0x4, offset = 0x4, fixed_abs, tag = 'smem constant byte address 0x4 - core index']
  #allocation1 [shape = 'u32[144,128]{1,0:T(1,128)}', space=vmem, size = 0x12000, scoped, tag = 'internal scratch']
  #allocation2 [shape = 'f32[16,256]{1,0:T(8,128)}', space=vmem, size = 0x4000, scoped, tag = 'scratch operand']
  %s0 = inlined_call_operand.vmem [shape: bf16[16,256], index: 0, kind: input, shape index: {}]
  %s1 = inlined_call_operand.vmem [shape: f32[1,256], index: 1, kind: input, shape index: {}]
  %s2 = inlined_call_operand.vmem [shape: f32[1,256], index: 2, kind: input, shape index: {}]
  %s3 = inlined_call_operand.vmem [shape: bf16[256,256], index: 3, kind: input, shape index: {}]
  %s4 = inlined_call_operand.vmem [shape: f32[1,256], index: 4, kind: input, shape index: {}]
  %s5 = inlined_call_operand.vmem [shape: bf16[16,256], index: 5, kind: output, shape index: {}]
  %s6 = sld [smem:[#allocation0]]
  $region38: #{discriminator_forward.6} parent=0
    _
  %s8 = ssub.s32 1, %s6
  %s9 = scalar_select 0, %s8, %s6
  // Predicated region
  $region2: #{discriminator_forward.6} parent=0 // pred_check
    _
  $region3: #{discriminator_forward.6} parent=0 // pred_check_branch
    %11 = sbr.rel (0) target = $region5
  $region4: #{discriminator_forward.6} parent=0 // pred_region
    _
  $region5: #{discriminator_forward.6} parent=0 // pred_fallthru
    _
  // Predicated region
  $region6: #{discriminator_forward.6} parent=0 // pred_check
    _
  $region7: #{discriminator_forward.6} parent=0 // pred_check_branch
    %13 = sbr.rel (0) target = $region9
  $region8: #{discriminator_forward.6} parent=0 // pred_region
    _
  $region9: #{discriminator_forward.6} parent=0 // pred_fallthru
    _
  // Predicated region
  $region10: #{discriminator_forward.6} parent=0 // pred_check
    _
  $region11: #{discriminator_forward.6} parent=0 // pred_check_branch
    %15 = sbr.rel (0) target = $region13
  $region12: #{discriminator_forward.6} parent=0 // pred_region
    _
  $region13: #{discriminator_forward.6} parent=0 // pred_fallthru
    _
  // Predicated region
  $region14: #{discriminator_forward.6} parent=0 // pred_check
    _
  $region15: #{discriminator_forward.6} parent=0 // pred_check_branch
    %17 = sbr.rel (0) target = $region17
  $region16: #{discriminator_forward.6} parent=0 // pred_region
    _
  $region17: #{discriminator_forward.6} parent=0 // pred_fallthru
    _
  // Predicated region
  $region18: #{discriminator_forward.6} parent=0 // pred_check
    _
  $region19: #{discriminator_forward.6} parent=0 // pred_check_branch
    %19 = sbr.rel (0) target = $region21
  $region20: #{discriminator_forward.6} parent=0 // pred_region
    _
  $region21: #{discriminator_forward.6} parent=0 // pred_fallthru
    _
  %p20 = scmp.eq.s32.totalorder 0, 0
  // Predicated region
  $region22: #{discriminator_forward.6} parent=0 // pred_check
    %p21 = pneg %p20
  $region23: #{discriminator_forward.6} parent=0 // pred_check_branch
    %23 = sbr.rel (%p21) target = $region25
  $region24: #{discriminator_forward.6} parent=0 // pred_region
    %24 = vst [vmem:[#allocation2] sm:$0xff] 0.0
    %25 = vst [vmem:[#allocation2 + $0x8] sm:$0xff] 0.0
    %26 = vst [vmem:[#allocation2 + $0x10] sm:$0xff] 0.0
    %27 = vst [vmem:[#allocation2 + $0x18] sm:$0xff] 0.0
  $region25: #{discriminator_forward.6} parent=0 // pred_fallthru
    _
  %v28 = vld [vmem:[%s0] sm:$0xff]
  %v29 = vld [vmem:[%s0 + $0x8] sm:$0xff]
  %v30 = vunpack.c.l.bf16 %v28
  %v31 = vunpack.c.h.bf16 %v28
  %v32 = vunpack.c.l.bf16 %v29
  %v33 = vunpack.c.h.bf16 %v29
  %v34 = vadd.f32 %v30, %v32
  %v35 = vrot.slane %v34, 4
  %v36 = vadd.f32 %v34, %v35
  %v37 = vrot.slane %v36, 2
  %v38 = vadd.f32 %v36, %v37
  %v39 = vrot.slane %v38, 1
  %v40 = vadd.f32 %v38, %v39
  %v41 = vadd.f32 %v31, %v33
  %v42 = vrot.slane %v41, 4
  %v43 = vadd.f32 %v41, %v42
  %v44 = vrot.slane %v43, 2
  %v45 = vadd.f32 %v43, %v44
  %v46 = vrot.slane %v45, 1
  %v47 = vadd.f32 %v45, %v46
  %v48 = vmul.f32 %v30, %v30
  %v49 = vmul.f32 %v31, %v31
  %v50 = vmul.f32 %v32, %v32
  %v51 = vmul.f32 %v33, %v33
  %v52 = vadd.f32 %v48, %v50
  %v53 = vrot.slane %v52, 4
  %v54 = vadd.f32 %v52, %v53
  %v55 = vrot.slane %v54, 2
  %v56 = vadd.f32 %v54, %v55
  %v57 = vrot.slane %v56, 1
  %v58 = vadd.f32 %v56, %v57
  %v59 = vadd.f32 %v49, %v51
  %v60 = vrot.slane %v59, 4
  %v61 = vadd.f32 %v59, %v60
  %v62 = vrot.slane %v61, 2
  %v63 = vadd.f32 %v61, %v62
  %v64 = vrot.slane %v63, 1
  %v65 = vadd.f32 %v63, %v64
  %v66 = vmul.f32 %v40, 0.0625
  %v67 = vmul.f32 %v47, 0.0625
  %v68 = vmul.f32 %v58, 0.0625
  %v69 = vmul.f32 %v65, 0.0625
  %v70 = vmul.f32 %v66, %v66
  %v71 = vmul.f32 %v67, %v67
  %v72 = vsub.f32 %v68, %v70
  %v73 = vsub.f32 %v69, %v71
  %v74 = vmax.f32 %v72, 0.0
  %v75 = vmax.f32 %v73, 0.0
  %v76 = vsub.f32 %v30, %v66
  %v77 = vsub.f32 %v31, %v67
  %v78 = vsub.f32 %v32, %v66
  %v79 = vsub.f32 %v33, %v67
  %v80 = vadd.f32 %v74, 1e-05
  %v81 = vadd.f32 %v75, 1e-05
  %v82 = vrsqrt.pop %v80
  %v83 = vrsqrt.pop %v81
  %v84 = vmul.f32 %v76, %v82
  %v85 = vmul.f32 %v77, %v83
  %v86 = vmul.f32 %v78, %v82
  %v87 = vmul.f32 %v79, %v83
  %v88 = vld [vmem:[%s1] sm:$0x3]
  %v90 = vlaneseq
  %v91 = vshrl.u32 %v90, 7
  %v92 = vsub.s32 0, %v91
  %v93 = vrot.slane %v88, %v92
  %v94 = vlaneseq
  %v95 = vshrl.u32 %v94, 7
  %v96 = vsub.s32 1, %v95
  %v97 = vrot.slane %v88, %v96
  %v100 = vmul.f32 %v84, %v93
  %v101 = vmul.f32 %v85, %v97
  %v102 = vmul.f32 %v86, %v93
  %v103 = vmul.f32 %v87, %v97
  %v104 = vld [vmem:[%s2] sm:$0x3]
  %v106 = vlaneseq
  %v107 = vshrl.u32 %v106, 7
  %v108 = vsub.s32 0, %v107
  %v109 = vrot.slane %v104, %v108
  %v110 = vlaneseq
  %v111 = vshrl.u32 %v110, 7
  %v112 = vsub.s32 1, %v111
  %v113 = vrot.slane %v104, %v112
  %v116 = vadd.f32 %v100, %v109
  %v117 = vadd.f32 %v101, %v113
  %v118 = vadd.f32 %v102, %v109
  %v119 = vadd.f32 %v103, %v113
  %v120 = vmax.f32 %v116, 0.0
  %v121 = vmax.f32 %v117, 0.0
  %v122 = vmax.f32 %v118, 0.0
  %v123 = vmax.f32 %v119, 0.0
  %v124 = vld [vmem:[#allocation2] sm:$0xff]
  %v125 = vld [vmem:[#allocation2 + $0x8] sm:$0xff]
  %v126 = vld [vmem:[#allocation2 + $0x10] sm:$0xff]
  %v127 = vld [vmem:[#allocation2 + $0x18] sm:$0xff]
  %v128 = vpack.c.bf16 %v122, %v120
  %v129 = vpack.c.bf16 %v123, %v121
  %v130 = vld [vmem:[%s3] sm:$0xff]
  %v131 = vld [vmem:[%s3 + $0x8] sm:$0xff]
  %v132 = vld [vmem:[%s3 + $0x10] sm:$0xff]
  %v133 = vld [vmem:[%s3 + $0x18] sm:$0xff]
  %v134 = vld [vmem:[%s3 + $0x20] sm:$0xff]
  %v135 = vld [vmem:[%s3 + $0x28] sm:$0xff]
  %v136 = vld [vmem:[%s3 + $0x30] sm:$0xff]
  %v137 = vld [vmem:[%s3 + $0x38] sm:$0xff]
  %v138 = vld [vmem:[%s3 + $0x40] sm:$0xff]
  %v139 = vld [vmem:[%s3 + $0x48] sm:$0xff]
  %v140 = vld [vmem:[%s3 + $0x50] sm:$0xff]
  %v141 = vld [vmem:[%s3 + $0x58] sm:$0xff]
  %v142 = vld [vmem:[%s3 + $0x60] sm:$0xff]
  %v143 = vld [vmem:[%s3 + $0x68] sm:$0xff]
  %v144 = vld [vmem:[%s3 + $0x70] sm:$0xff]
  %v145 = vld [vmem:[%s3 + $0x78] sm:$0xff]
  %v146 = vld [vmem:[%s3 + $0x80] sm:$0xff]
  %v147 = vld [vmem:[%s3 + $0x88] sm:$0xff]
  %v148 = vld [vmem:[%s3 + $0x90] sm:$0xff]
  %v149 = vld [vmem:[%s3 + $0x98] sm:$0xff]
  %v150 = vld [vmem:[%s3 + $0xa0] sm:$0xff]
  %v151 = vld [vmem:[%s3 + $0xa8] sm:$0xff]
  %v152 = vld [vmem:[%s3 + $0xb0] sm:$0xff]
  %v153 = vld [vmem:[%s3 + $0xb8] sm:$0xff]
  %v154 = vld [vmem:[%s3 + $0xc0] sm:$0xff]
  %v155 = vld [vmem:[%s3 + $0xc8] sm:$0xff]
  %v156 = vld [vmem:[%s3 + $0xd0] sm:$0xff]
  %v157 = vld [vmem:[%s3 + $0xd8] sm:$0xff]
  %v158 = vld [vmem:[%s3 + $0xe0] sm:$0xff]
  %v159 = vld [vmem:[%s3 + $0xe8] sm:$0xff]
  %v160 = vld [vmem:[%s3 + $0xf0] sm:$0xff]
  %v161 = vld [vmem:[%s3 + $0xf8] sm:$0xff]
  %v194 = vunpack.c.l.b16 %v130
  %v195 = vunpack.c.h.b16 %v130
  %v196 = vunpack.c.l.b16 %v131
  %v197 = vunpack.c.h.b16 %v131
  %v198 = vunpack.c.l.b16 %v132
  %v199 = vunpack.c.h.b16 %v132
  %v200 = vunpack.c.l.b16 %v133
  %v201 = vunpack.c.h.b16 %v133
  %v202 = vunpack.c.l.b16 %v134
  %v203 = vunpack.c.h.b16 %v134
  %v204 = vunpack.c.l.b16 %v135
  %v205 = vunpack.c.h.b16 %v135
  %v206 = vunpack.c.l.b16 %v136
  %v207 = vunpack.c.h.b16 %v136
  %v208 = vunpack.c.l.b16 %v137
  %v209 = vunpack.c.h.b16 %v137
  %v210 = vunpack.c.l.b16 %v138
  %v211 = vunpack.c.h.b16 %v138
  %v212 = vunpack.c.l.b16 %v139
  %v213 = vunpack.c.h.b16 %v139
  %v214 = vunpack.c.l.b16 %v140
  %v215 = vunpack.c.h.b16 %v140
  %v216 = vunpack.c.l.b16 %v141
  %v217 = vunpack.c.h.b16 %v141
  %v218 = vunpack.c.l.b16 %v142
  %v219 = vunpack.c.h.b16 %v142
  %v220 = vunpack.c.l.b16 %v143
  %v221 = vunpack.c.h.b16 %v143
  %v222 = vunpack.c.l.b16 %v144
  %v223 = vunpack.c.h.b16 %v144
  %v224 = vunpack.c.l.b16 %v145
  %v225 = vunpack.c.h.b16 %v145
  %v226 = vunpack.c.l.b16 %v146
  %v227 = vunpack.c.h.b16 %v146
  %v228 = vunpack.c.l.b16 %v147
  %v229 = vunpack.c.h.b16 %v147
  %v230 = vunpack.c.l.b16 %v148
  %v231 = vunpack.c.h.b16 %v148
  %v232 = vunpack.c.l.b16 %v149
  %v233 = vunpack.c.h.b16 %v149
  %v234 = vunpack.c.l.b16 %v150
  %v235 = vunpack.c.h.b16 %v150
  %v236 = vunpack.c.l.b16 %v151
  %v237 = vunpack.c.h.b16 %v151
  %v238 = vunpack.c.l.b16 %v152
  %v239 = vunpack.c.h.b16 %v152
  %v240 = vunpack.c.l.b16 %v153
  %v241 = vunpack.c.h.b16 %v153
  %v242 = vunpack.c.l.b16 %v154
  %v243 = vunpack.c.h.b16 %v154
  %v244 = vunpack.c.l.b16 %v155
  %v245 = vunpack.c.h.b16 %v155
  %v246 = vunpack.c.l.b16 %v156
  %v247 = vunpack.c.h.b16 %v156
  %v248 = vunpack.c.l.b16 %v157
  %v249 = vunpack.c.h.b16 %v157
  %v250 = vunpack.c.l.b16 %v158
  %v251 = vunpack.c.h.b16 %v158
  %v252 = vunpack.c.l.b16 %v159
  %v253 = vunpack.c.h.b16 %v159
  %v254 = vunpack.c.l.b16 %v160
  %v255 = vunpack.c.h.b16 %v160
  %v256 = vunpack.c.l.b16 %v161
  %v257 = vunpack.c.h.b16 %v161
  %v258 = vpack.c.b16 %v196, %v194
  %v259 = vpack.c.b16 %v197, %v195
  %v260 = vpack.c.b16 %v200, %v198
  %v261 = vpack.c.b16 %v201, %v199
  %v262 = vpack.c.b16 %v204, %v202
  %v263 = vpack.c.b16 %v205, %v203
  %v264 = vpack.c.b16 %v208, %v206
  %v265 = vpack.c.b16 %v209, %v207
  %v266 = vpack.c.b16 %v212, %v210
  %v267 = vpack.c.b16 %v213, %v211
  %v268 = vpack.c.b16 %v216, %v214
  %v269 = vpack.c.b16 %v217, %v215
  %v270 = vpack.c.b16 %v220, %v218
  %v271 = vpack.c.b16 %v221, %v219
  %v272 = vpack.c.b16 %v224, %v222
  %v273 = vpack.c.b16 %v225, %v223
  %v274 = vpack.c.b16 %v228, %v226
  %v275 = vpack.c.b16 %v229, %v227
  %v276 = vpack.c.b16 %v232, %v230
  %v277 = vpack.c.b16 %v233, %v231
  %v278 = vpack.c.b16 %v236, %v234
  %v279 = vpack.c.b16 %v237, %v235
  %v280 = vpack.c.b16 %v240, %v238
  %v281 = vpack.c.b16 %v241, %v239
  %v282 = vpack.c.b16 %v244, %v242
  %v283 = vpack.c.b16 %v245, %v243
  %v284 = vpack.c.b16 %v248, %v246
  %v285 = vpack.c.b16 %v249, %v247
  %v286 = vpack.c.b16 %v252, %v250
  %v287 = vpack.c.b16 %v253, %v251
  %v288 = vpack.c.b16 %v256, %v254
  %v289 = vpack.c.b16 %v257, %v255
  %322 = vmatprep.subr.bf16.mxu0 %v273
  %323 = vmatpush1.bf16.msra.mxu0 %v272
  %324 = vmatprep.subr.bf16.mxu0 %v271
  %325 = vmatpush1.bf16.msra.mxu0 %v270
  %326 = vmatprep.subr.bf16.mxu0 %v269
  %327 = vmatpush1.bf16.msra.mxu0 %v268
  %328 = vmatprep.subr.bf16.mxu0 %v267
  %329 = vmatpush1.bf16.msra.mxu0 %v266
  %330 = vmatprep.subr.bf16.mxu0 %v265
  %331 = vmatpush1.bf16.msra.mxu0 %v264
  %332 = vmatprep.subr.bf16.mxu0 %v263
  %333 = vmatpush1.bf16.msra.mxu0 %v262
  %334 = vmatprep.subr.bf16.mxu0 %v261
  %335 = vmatpush1.bf16.msra.mxu0 %v260
  %336 = vmatprep.subr.bf16.mxu0 %v259
  %337 = vmatpush1.bf16.msra.mxu0 %v258
  %338 = vmatprep.subr.bf16.mxu0 %v289
  %339 = vmatpush2.bf16.msra.mxu0 %v288
  %340 = vmatprep.subr.bf16.mxu0 %v287
  %341 = vmatpush2.bf16.msra.mxu0 %v286
  %342 = vmatprep.subr.bf16.mxu0 %v285
  %343 = vmatpush2.bf16.msra.mxu0 %v284
  %344 = vmatprep.subr.bf16.mxu0 %v283
  %345 = vmatpush2.bf16.msra.mxu0 %v282
  %346 = vmatprep.subr.bf16.mxu0 %v281
  %347 = vmatpush2.bf16.msra.mxu0 %v280
  %348 = vmatprep.subr.bf16.mxu0 %v279
  %349 = vmatpush2.bf16.msra.mxu0 %v278
  %350 = vmatprep.subr.bf16.mxu0 %v277
  %351 = vmatpush2.bf16.msra.mxu0 %v276
  %352 = vmatprep.subr.bf16.mxu0 %v275
  %353 = vmatpush2.bf16.msra.mxu0 %v274
  %354 = vmatprep.mubr.bf16.mxu0 %v129
  %355 = vmatmul.mubr.bf16.gmra.mxu0 %v128
  %v356 = vpop.f32.mrf.mxu0
  %v357 = vadd.f32 0.0, %v356
  %v358 = vpop.f32.mrf.mxu0
  %v359 = vadd.f32 0.0, %v358
  %v360 = vpop.f32.mrf.mxu0
  %v361 = vadd.f32 0.0, %v360
  %v362 = vpop.f32.mrf.mxu0
  %v363 = vadd.f32 0.0, %v362
  %364 = vdwg.mxu0
  %v365 = vadd.f32 %v124, %v357
  %v366 = vadd.f32 %v125, %v359
  %v367 = vadd.f32 %v126, %v361
  %v368 = vadd.f32 %v127, %v363
  %369 = vst [vmem:[#allocation2] sm:$0xff] %v365
  %370 = vst [vmem:[#allocation2 + $0x8] sm:$0xff] %v366
  %371 = vst [vmem:[#allocation2 + $0x10] sm:$0xff] %v367
  %372 = vst [vmem:[#allocation2 + $0x18] sm:$0xff] %v368
  // Predicated region
  $region26: #{discriminator_forward.6} parent=0 // pred_check
    %p373 = pneg %p20
  $region27: #{discriminator_forward.6} parent=0 // pred_check_branch
    %375 = sbr.rel (%p373) target = $region29
  $region28: #{discriminator_forward.6} parent=0 // pred_region
    %v376 = vld [vmem:[#allocation2] sm:$0xff]
    %v377 = vld [vmem:[#allocation2 + $0x8] sm:$0xff]
    %v378 = vld [vmem:[#allocation2 + $0x10] sm:$0xff]
    %v379 = vld [vmem:[#allocation2 + $0x18] sm:$0xff]
    %v380 = vld [vmem:[%s4] sm:$0x3]
    %v382 = vlaneseq
    %v383 = vshrl.u32 %v382, 7
    %v384 = vsub.s32 0, %v383
    %v385 = vrot.slane %v380, %v384
    %v386 = vlaneseq
    %v387 = vshrl.u32 %v386, 7
    %v388 = vsub.s32 1, %v387
    %v389 = vrot.slane %v380, %v388
    %v392 = vadd.f32 %v376, %v385
    %v393 = vadd.f32 %v377, %v389
    %v394 = vadd.f32 %v378, %v385
    %v395 = vadd.f32 %v379, %v389
    %v396 = vpack.c.bf16 %v394, %v392
    %v397 = vpack.c.bf16 %v395, %v393
    %v400 = vunpack.c.l.b16 %v396
    %v401 = vunpack.c.l.b16 %v397
    %v402 = vunpack.c.h.b16 %v396
    %v403 = vunpack.c.h.b16 %v397
    %v404 = vpack.c.b16 %v401, %v400
    %v405 = vpack.c.b16 %v403, %v402
    %408 = vst [vmem:[%s5] sm:$0xff] %v404
    %409 = vst [vmem:[%s5 + $0x8] sm:$0xff] %v405
  $region29: #{discriminator_forward.6} parent=0 // pred_fallthru
    _
  // Predicated region
  $region30: #{discriminator_forward.6} parent=0 // pred_check
    _
  $region31: #{discriminator_forward.6} parent=0 // pred_check_branch
    %411 = sbr.rel (0) target = $region33
  $region32: #{discriminator_forward.6} parent=0 // pred_region
    _
  $region33: #{discriminator_forward.6} parent=0 // pred_fallthru
    _
  // Predicated region
  $region34: #{discriminator_forward.6} parent=0 // pred_check
    _
  $region35: #{discriminator_forward.6} parent=0 // pred_check_branch
    %413 = sbr.rel (0) target = $region37
  $region36: #{discriminator_forward.6} parent=0 // pred_region
    _
  $region37: #{discriminator_forward.6} parent=0 // pred_fallthru
    _

// kernel: discriminator_forward.7
$region0: #{discriminator_forward.7}
  #allocation0 [shape = 'u32[]', space=smem, size = 0x4, offset = 0x4, fixed_abs, tag = 'smem constant byte address 0x4 - core index']
  #allocation1 [shape = 'u32[144,128]{1,0:T(1,128)}', space=vmem, size = 0x12000, scoped, tag = 'internal scratch']
  #allocation2 [shape = 'f32[16,128]{1,0:T(8,128)}', space=vmem, size = 0x2000, scoped, tag = 'scratch operand']
  %s0 = inlined_call_operand.vmem [shape: bf16[16,256], index: 0, kind: input, shape index: {}]
  %s1 = inlined_call_operand.vmem [shape: f32[1,256], index: 1, kind: input, shape index: {}]
  %s2 = inlined_call_operand.vmem [shape: f32[1,256], index: 2, kind: input, shape index: {}]
  %s3 = inlined_call_operand.vmem [shape: bf16[256,128], index: 3, kind: input, shape index: {}]
  %s4 = inlined_call_operand.vmem [shape: f32[1,128], index: 4, kind: input, shape index: {}]
  %s5 = inlined_call_operand.vmem [shape: f32[16,128], index: 5, kind: output, shape index: {}]
  %s6 = sld [smem:[#allocation0]]
  $region38: #{discriminator_forward.7} parent=0
    _
  %s8 = ssub.s32 1, %s6
  %s9 = scalar_select 0, %s8, %s6
  // Predicated region
  $region2: #{discriminator_forward.7} parent=0 // pred_check
    _
  $region3: #{discriminator_forward.7} parent=0 // pred_check_branch
    %11 = sbr.rel (0) target = $region5
  $region4: #{discriminator_forward.7} parent=0 // pred_region
    _
  $region5: #{discriminator_forward.7} parent=0 // pred_fallthru
    _
  // Predicated region
  $region6: #{discriminator_forward.7} parent=0 // pred_check
    _
  $region7: #{discriminator_forward.7} parent=0 // pred_check_branch
    %13 = sbr.rel (0) target = $region9
  $region8: #{discriminator_forward.7} parent=0 // pred_region
    _
  $region9: #{discriminator_forward.7} parent=0 // pred_fallthru
    _
  // Predicated region
  $region10: #{discriminator_forward.7} parent=0 // pred_check
    _
  $region11: #{discriminator_forward.7} parent=0 // pred_check_branch
    %15 = sbr.rel (0) target = $region13
  $region12: #{discriminator_forward.7} parent=0 // pred_region
    _
  $region13: #{discriminator_forward.7} parent=0 // pred_fallthru
    _
  // Predicated region
  $region14: #{discriminator_forward.7} parent=0 // pred_check
    _
  $region15: #{discriminator_forward.7} parent=0 // pred_check_branch
    %17 = sbr.rel (0) target = $region17
  $region16: #{discriminator_forward.7} parent=0 // pred_region
    _
  $region17: #{discriminator_forward.7} parent=0 // pred_fallthru
    _
  // Predicated region
  $region18: #{discriminator_forward.7} parent=0 // pred_check
    _
  $region19: #{discriminator_forward.7} parent=0 // pred_check_branch
    %19 = sbr.rel (0) target = $region21
  $region20: #{discriminator_forward.7} parent=0 // pred_region
    _
  $region21: #{discriminator_forward.7} parent=0 // pred_fallthru
    _
  %p21 = scmp.eq.s32.totalorder 0, 0
  // Predicated region
  $region22: #{discriminator_forward.7} parent=0 // pred_check
    %p22 = pneg %p21
  $region23: #{discriminator_forward.7} parent=0 // pred_check_branch
    %24 = sbr.rel (%p22) target = $region25
  $region24: #{discriminator_forward.7} parent=0 // pred_region
    %25 = vst [vmem:[#allocation2] sm:$0xff] 0.0
    %26 = vst [vmem:[#allocation2 + $0x8] sm:$0xff] 0.0
  $region25: #{discriminator_forward.7} parent=0 // pred_fallthru
    _
  %v27 = vld [vmem:[%s0] sm:$0xff]
  %v28 = vld [vmem:[%s0 + $0x8] sm:$0xff]
  %v29 = vunpack.c.l.bf16 %v27
  %v30 = vunpack.c.h.bf16 %v27
  %v31 = vunpack.c.l.bf16 %v28
  %v32 = vunpack.c.h.bf16 %v28
  %v33 = vadd.f32 %v29, %v31
  %v34 = vrot.slane %v33, 4
  %v35 = vadd.f32 %v33, %v34
  %v36 = vrot.slane %v35, 2
  %v37 = vadd.f32 %v35, %v36
  %v38 = vrot.slane %v37, 1
  %v39 = vadd.f32 %v37, %v38
  %v40 = vadd.f32 %v30, %v32
  %v41 = vrot.slane %v40, 4
  %v42 = vadd.f32 %v40, %v41
  %v43 = vrot.slane %v42, 2
  %v44 = vadd.f32 %v42, %v43
  %v45 = vrot.slane %v44, 1
  %v46 = vadd.f32 %v44, %v45
  %v47 = vmul.f32 %v29, %v29
  %v48 = vmul.f32 %v30, %v30
  %v49 = vmul.f32 %v31, %v31
  %v50 = vmul.f32 %v32, %v32
  %v51 = vadd.f32 %v47, %v49
  %v52 = vrot.slane %v51, 4
  %v53 = vadd.f32 %v51, %v52
  %v54 = vrot.slane %v53, 2
  %v55 = vadd.f32 %v53, %v54
  %v56 = vrot.slane %v55, 1
  %v57 = vadd.f32 %v55, %v56
  %v58 = vadd.f32 %v48, %v50
  %v59 = vrot.slane %v58, 4
  %v60 = vadd.f32 %v58, %v59
  %v61 = vrot.slane %v60, 2
  %v62 = vadd.f32 %v60, %v61
  %v63 = vrot.slane %v62, 1
  %v64 = vadd.f32 %v62, %v63
  %v65 = vmul.f32 %v39, 0.0625
  %v66 = vmul.f32 %v46, 0.0625
  %v67 = vmul.f32 %v57, 0.0625
  %v68 = vmul.f32 %v64, 0.0625
  %v69 = vmul.f32 %v65, %v65
  %v70 = vmul.f32 %v66, %v66
  %v71 = vsub.f32 %v67, %v69
  %v72 = vsub.f32 %v68, %v70
  %v73 = vmax.f32 %v71, 0.0
  %v74 = vmax.f32 %v72, 0.0
  %v75 = vsub.f32 %v29, %v65
  %v76 = vsub.f32 %v30, %v66
  %v77 = vsub.f32 %v31, %v65
  %v78 = vsub.f32 %v32, %v66
  %v79 = vadd.f32 %v73, 1e-05
  %v80 = vadd.f32 %v74, 1e-05
  %v81 = vrsqrt.pop %v79
  %v82 = vrsqrt.pop %v80
  %v83 = vmul.f32 %v75, %v81
  %v84 = vmul.f32 %v76, %v82
  %v85 = vmul.f32 %v77, %v81
  %v86 = vmul.f32 %v78, %v82
  %v87 = vld [vmem:[%s1] sm:$0x3]
  %v89 = vlaneseq
  %v90 = vshrl.u32 %v89, 7
  %v91 = vsub.s32 0, %v90
  %v92 = vrot.slane %v87, %v91
  %v93 = vlaneseq
  %v94 = vshrl.u32 %v93, 7
  %v95 = vsub.s32 1, %v94
  %v96 = vrot.slane %v87, %v95
  %v99 = vmul.f32 %v83, %v92
  %v100 = vmul.f32 %v84, %v96
  %v101 = vmul.f32 %v85, %v92
  %v102 = vmul.f32 %v86, %v96
  %v103 = vld [vmem:[%s2] sm:$0x3]
  %v105 = vlaneseq
  %v106 = vshrl.u32 %v105, 7
  %v107 = vsub.s32 0, %v106
  %v108 = vrot.slane %v103, %v107
  %v109 = vlaneseq
  %v110 = vshrl.u32 %v109, 7
  %v111 = vsub.s32 1, %v110
  %v112 = vrot.slane %v103, %v111
  %v115 = vadd.f32 %v99, %v108
  %v116 = vadd.f32 %v100, %v112
  %v117 = vadd.f32 %v101, %v108
  %v118 = vadd.f32 %v102, %v112
  %v119 = vmax.f32 %v115, 0.0
  %v120 = vmax.f32 %v116, 0.0
  %v121 = vmax.f32 %v117, 0.0
  %v122 = vmax.f32 %v118, 0.0
  %v123 = vld [vmem:[#allocation2] sm:$0xff]
  %v124 = vld [vmem:[#allocation2 + $0x8] sm:$0xff]
  %v125 = vpack.c.bf16 %v121, %v119
  %v126 = vpack.c.bf16 %v122, %v120
  %v127 = vld [vmem:[%s3] sm:$0xf]
  %v128 = vld [vmem:[%s3 + $0x4] sm:$0xf]
  %v129 = vld [vmem:[%s3 + $0x8] sm:$0xf]
  %v130 = vld [vmem:[%s3 + $0xc] sm:$0xf]
  %v131 = vld [vmem:[%s3 + $0x10] sm:$0xf]
  %v132 = vld [vmem:[%s3 + $0x14] sm:$0xf]
  %v133 = vld [vmem:[%s3 + $0x18] sm:$0xf]
  %v134 = vld [vmem:[%s3 + $0x1c] sm:$0xf]
  %v135 = vld [vmem:[%s3 + $0x20] sm:$0xf]
  %v136 = vld [vmem:[%s3 + $0x24] sm:$0xf]
  %v137 = vld [vmem:[%s3 + $0x28] sm:$0xf]
  %v138 = vld [vmem:[%s3 + $0x2c] sm:$0xf]
  %v139 = vld [vmem:[%s3 + $0x30] sm:$0xf]
  %v140 = vld [vmem:[%s3 + $0x34] sm:$0xf]
  %v141 = vld [vmem:[%s3 + $0x38] sm:$0xf]
  %v142 = vld [vmem:[%s3 + $0x3c] sm:$0xf]
  %v143 = vld [vmem:[%s3 + $0x40] sm:$0xf]
  %v144 = vld [vmem:[%s3 + $0x44] sm:$0xf]
  %v145 = vld [vmem:[%s3 + $0x48] sm:$0xf]
  %v146 = vld [vmem:[%s3 + $0x4c] sm:$0xf]
  %v147 = vld [vmem:[%s3 + $0x50] sm:$0xf]
  %v148 = vld [vmem:[%s3 + $0x54] sm:$0xf]
  %v149 = vld [vmem:[%s3 + $0x58] sm:$0xf]
  %v150 = vld [vmem:[%s3 + $0x5c] sm:$0xf]
  %v151 = vld [vmem:[%s3 + $0x60] sm:$0xf]
  %v152 = vld [vmem:[%s3 + $0x64] sm:$0xf]
  %v153 = vld [vmem:[%s3 + $0x68] sm:$0xf]
  %v154 = vld [vmem:[%s3 + $0x6c] sm:$0xf]
  %v155 = vld [vmem:[%s3 + $0x70] sm:$0xf]
  %v156 = vld [vmem:[%s3 + $0x74] sm:$0xf]
  %v157 = vld [vmem:[%s3 + $0x78] sm:$0xf]
  %v158 = vld [vmem:[%s3 + $0x7c] sm:$0xf]
  %v191 = vunpack.c.l.b16 %v127
  %v192 = vunpack.c.l.b16 %v128
  %v193 = vunpack.c.l.b16 %v129
  %v194 = vunpack.c.l.b16 %v130
  %v195 = vunpack.c.l.b16 %v131
  %v196 = vunpack.c.l.b16 %v132
  %v197 = vunpack.c.l.b16 %v133
  %v198 = vunpack.c.l.b16 %v134
  %v199 = vunpack.c.l.b16 %v135
  %v200 = vunpack.c.l.b16 %v136
  %v201 = vunpack.c.l.b16 %v137
  %v202 = vunpack.c.l.b16 %v138
  %v203 = vunpack.c.l.b16 %v139
  %v204 = vunpack.c.l.b16 %v140
  %v205 = vunpack.c.l.b16 %v141
  %v206 = vunpack.c.l.b16 %v142
  %v207 = vunpack.c.l.b16 %v143
  %v208 = vunpack.c.l.b16 %v144
  %v209 = vunpack.c.l.b16 %v145
  %v210 = vunpack.c.l.b16 %v146
  %v211 = vunpack.c.l.b16 %v147
  %v212 = vunpack.c.l.b16 %v148
  %v213 = vunpack.c.l.b16 %v149
  %v214 = vunpack.c.l.b16 %v150
  %v215 = vunpack.c.l.b16 %v151
  %v216 = vunpack.c.l.b16 %v152
  %v217 = vunpack.c.l.b16 %v153
  %v218 = vunpack.c.l.b16 %v154
  %v219 = vunpack.c.l.b16 %v155
  %v220 = vunpack.c.l.b16 %v156
  %v221 = vunpack.c.l.b16 %v157
  %v222 = vunpack.c.l.b16 %v158
  %v223 = vpack.c.b16 %v192, %v191
  %v224 = vpack.c.b16 %v194, %v193
  %v225 = vpack.c.b16 %v196, %v195
  %v226 = vpack.c.b16 %v198, %v197
  %v227 = vpack.c.b16 %v200, %v199
  %v228 = vpack.c.b16 %v202, %v201
  %v229 = vpack.c.b16 %v204, %v203
  %v230 = vpack.c.b16 %v206, %v205
  %v231 = vpack.c.b16 %v208, %v207
  %v232 = vpack.c.b16 %v210, %v209
  %v233 = vpack.c.b16 %v212, %v211
  %v234 = vpack.c.b16 %v214, %v213
  %v235 = vpack.c.b16 %v216, %v215
  %v236 = vpack.c.b16 %v218, %v217
  %v237 = vpack.c.b16 %v220, %v219
  %v238 = vpack.c.b16 %v222, %v221
  %255 = vmatprep.subr.bf16.mxu0 0
  %256 = vmatpush1.bf16.msra.mxu0 %v230
  %257 = vmatprep.subr.bf16.mxu0 0
  %258 = vmatpush1.bf16.msra.mxu0 %v229
  %259 = vmatprep.subr.bf16.mxu0 0
  %260 = vmatpush1.bf16.msra.mxu0 %v228
  %261 = vmatprep.subr.bf16.mxu0 0
  %262 = vmatpush1.bf16.msra.mxu0 %v227
  %263 = vmatprep.subr.bf16.mxu0 0
  %264 = vmatpush1.bf16.msra.mxu0 %v226
  %265 = vmatprep.subr.bf16.mxu0 0
  %266 = vmatpush1.bf16.msra.mxu0 %v225
  %267 = vmatprep.subr.bf16.mxu0 0
  %268 = vmatpush1.bf16.msra.mxu0 %v224
  %269 = vmatprep.subr.bf16.mxu0 0
  %270 = vmatpush1.bf16.msra.mxu0 %v223
  %271 = vmatprep.subr.bf16.mxu0 0
  %272 = vmatpush2.bf16.msra.mxu0 %v238
  %273 = vmatprep.subr.bf16.mxu0 0
  %274 = vmatpush2.bf16.msra.mxu0 %v237
  %275 = vmatprep.subr.bf16.mxu0 0
  %276 = vmatpush2.bf16.msra.mxu0 %v236
  %277 = vmatprep.subr.bf16.mxu0 0
  %278 = vmatpush2.bf16.msra.mxu0 %v235
  %279 = vmatprep.subr.bf16.mxu0 0
  %280 = vmatpush2.bf16.msra.mxu0 %v234
  %281 = vmatprep.subr.bf16.mxu0 0
  %282 = vmatpush2.bf16.msra.mxu0 %v233
  %283 = vmatprep.subr.bf16.mxu0 0
  %284 = vmatpush2.bf16.msra.mxu0 %v232
  %285 = vmatprep.subr.bf16.mxu0 0
  %286 = vmatpush2.bf16.msra.mxu0 %v231
  %287 = vmatprep.mubr.bf16.mxu0 %v126
  %288 = vmatmul.mubr.bf16.gmra.mxu0 %v125
  %v289 = vpop.f32.mrf.mxu0
  %v290 = vadd.f32 0.0, %v289
  %v291 = vpop.f32.mrf.mxu0
  %v292 = vpop.f32.mrf.mxu0
  %v293 = vadd.f32 0.0, %v292
  %v294 = vpop.f32.mrf.mxu0
  %295 = vdwg.mxu0
  %v296 = vadd.f32 %v123, %v290
  %v297 = vadd.f32 %v124, %v293
  %298 = vst [vmem:[#allocation2] sm:$0xff] %v296
  %299 = vst [vmem:[#allocation2 + $0x8] sm:$0xff] %v297
  // Predicated region
  $region26: #{discriminator_forward.7} parent=0 // pred_check
    %p300 = pneg %p21
  $region27: #{discriminator_forward.7} parent=0 // pred_check_branch
    %302 = sbr.rel (%p300) target = $region29
  $region28: #{discriminator_forward.7} parent=0 // pred_region
    %v303 = vld [vmem:[#allocation2] sm:$0xff]
    %v304 = vld [vmem:[#allocation2 + $0x8] sm:$0xff]
    %v305 = vld [vmem:[%s4] sm:$0x1]
    %v307 = vlaneseq
    %v308 = vshrl.u32 %v307, 7
    %v309 = vsub.s32 0, %v308
    %v310 = vrot.slane %v305, %v309
    %v312 = vadd.f32 %v303, %v310
    %v313 = vadd.f32 %v304, %v310
    %v314 = vlaneseq
    %v315 = vand.u32 %v314, 127
    %vm316 = vcmp.lt.s32.totalorder %v315, 2
    %v317 = vsel %vm316, %v312, -1e+30
    %v318 = vsel %vm316, %v313, -1e+30
    %319 = vmax.xlane.f32.xlu0 %v317
    %v320 = vpop.xlane.xlu0 %319
    %321 = vmax.xlane.f32.xlu0 %v318
    %v322 = vpop.xlane.xlu0 %321
    %v323 = vsub.f32 %v317, %v320
    %v324 = vsub.f32 %v318, %v322
    %v325 = vmul.f32 %v323, 1.442695
    %v326 = vpow.pop %v325
    %v327 = vmul.f32 %v324, 1.442695
    %v328 = vpow.pop %v327
    %329 = vadd.xlane.f32.xlu0 %v326
    %v330 = vpop.xlane.xlu0 %329
    %331 = vadd.xlane.f32.xlu0 %v328
    %v332 = vpop.xlane.xlu0 %331
    %v333 = vlog2.pop %v330
    %v334 = vmul.f32 %v333, 0.6931472
    %v335 = vlog2.pop %v332
    %v336 = vmul.f32 %v335, 0.6931472
    %v337 = vsub.f32 %v323, %v334
    %v338 = vsub.f32 %v324, %v336
    %339 = vst [vmem:[%s5] sm:$0xff] %v337
    %340 = vst [vmem:[%s5 + $0x8] sm:$0xff] %v338
  $region29: #{discriminator_forward.7} parent=0 // pred_fallthru
    _
  // Predicated region
  $region30: #{discriminator_forward.7} parent=0 // pred_check
    _
  $region31: #{discriminator_forward.7} parent=0 // pred_check_branch
    %342 = sbr.rel (0) target = $region33
  $region32: #{discriminator_forward.7} parent=0 // pred_region
    _
  $region33: #{discriminator_forward.7} parent=0 // pred_fallthru
    _
  // Predicated region
  $region34: #{discriminator_forward.7} parent=0 // pred_check
    _
  $region35: #{discriminator_forward.7} parent=0 // pred_check_branch
    %344 = sbr.rel (0) target = $region37
  $region36: #{discriminator_forward.7} parent=0 // pred_region
    _
  $region37: #{discriminator_forward.7} parent=0 // pred_fallthru
    _

</llo_original>
